<compile_context>
chip_gen: v7x
topology: tpu7x:2x2x1
jax: 0.10.0
libtpu: 0.0.40
codegen_flags: <defaults>
</compile_context>

<pallas_src>
import functools

import jax
import jax.numpy as jnp
from jax.experimental import pallas as pl
from jax.experimental.pallas import tpu as pltpu


def _vae_kernel(x_ref, eps_ref,
                w1_ref, b1_ref,
                wh_ref, bh_ref,
                w3_ref, b3_ref,
                w4_ref, b4_ref,
                recon_ref, mu_ref, lv_ref,
                *, z_dim):
    f32 = jnp.float32
    bf16 = jnp.bfloat16

    x = x_ref[...]                                     # [TM, x_dim] bf16 (cast fused upstream)

    # ---- encode: h = relu(x @ W1 + b1)  (bf16 MXU inputs, f32 accumulate) ----
    h = jnp.dot(x, w1_ref[...], preferred_element_type=f32) + b1_ref[...]
    h = jnp.maximum(h, 0.0)

    # ---- fused mu|log_var head: one lane-dense [h_dim, 128] matmul, sliced in-register ----
    heads = jnp.dot(h.astype(bf16), wh_ref[...], preferred_element_type=f32) + bh_ref[...]
    mu = heads[:, :z_dim]
    lv = heads[:, z_dim:2 * z_dim]
    mu_ref[...] = mu                                   # direct (TM, z_dim) outputs: no
    lv_ref[...] = lv                                   # post-kernel re-slicing traffic

    # ---- reparametrize: z = mu + eps * exp(0.5 * log_var) (f32 VPU/EUP) ----
    std = jnp.exp(0.5 * lv)
    z = mu + eps_ref[...] * std

    # ---- decode: h2 = relu(z @ W3 + b3); recon = sigmoid(h2 @ W4 + b4) ----
    h2 = jnp.dot(z.astype(bf16), w3_ref[...], preferred_element_type=f32) + b3_ref[...]
    h2 = jnp.maximum(h2, 0.0)
    logits = jnp.dot(h2.astype(bf16), w4_ref[...], preferred_element_type=f32) + b4_ref[...]

    # numerically stable sigmoid: exp(-|x|) never overflows; exact reciprocal on the EUP.
    e = jnp.exp(-jnp.abs(logits))
    inv = pl.reciprocal(1.0 + e, approx=False)
    recon_ref[...] = jnp.where(logits >= 0.0, inv, e * inv).astype(recon_ref.dtype)


def _choose_tm(n_rows, *, tm_max=512, tm_min=128):
    """Pick the batch tile.

    Target a big tile (512 rows) so the ~0.35 us per-grid-step pipeline overhead is
    amortized on this HBM-bound kernel, but cap it so the grid keeps >=2 steps when the
    batch allows (v7x megacore sharding), with a 128-row floor for tiny batches.
    """
    tm_max = max(tm_min, (tm_max // tm_min) * tm_min)
    cap_two_steps = max(tm_min, ((n_rows // 2) // tm_min) * tm_min)
    return min(tm_max, cap_two_steps)


def vae_forward(x, eps, params, *, tm=None, recon_dtype=jnp.bfloat16):
    """x: [N, C, H, W]; eps: [N, z_dim] (the randn_like draw, supplied externally).

    Returns (reconst_x [N, x_dim], mu [N, z_dim], log_var [N, z_dim]).
    """
    (w1, b1, wh, bh, w3, b3, w4, b4) = params
    x_dim, h_dim = w1.shape
    z_dim = w3.shape[0]
    head_pad = wh.shape[1]

    # bf16 activation input: the cast fuses into the upstream producer under jit and
    # halves the dominant x HBM stream; MXU math is unchanged (weights already bf16).
    x2d = x.reshape(-1, x_dim).astype(jnp.bfloat16)    # x.view(-1, x_dim)
    eps = eps.astype(jnp.float32)
    n = x2d.shape[0]

    if tm is None:
        tm = _choose_tm(n)

    # Pad the batch to an MXU-aligned multiple of the M tile, slice back after.
    n_pad = pl.cdiv(n, tm) * tm
    if n_pad != n:
        x2d = jnp.pad(x2d, ((0, n_pad - n), (0, 0)))
        eps = jnp.pad(eps, ((0, n_pad - n), (0, 0)))

    grid = (n_pad // tm,)

    def batch_spec(cols):
        return pl.BlockSpec((tm, cols), lambda i: (i, 0))

    def resident_spec(shape):
        # Constant index_map: weights/biases stay VMEM-resident across all batch tiles.
        return pl.BlockSpec(shape, lambda i: (0, 0))

    in_arrays = (x2d, eps, w1, b1, wh, bh, w3, b3, w4, b4)
    in_specs = [
        batch_spec(x_dim),                 # x tile (bf16)
        batch_spec(z_dim),                 # eps tile (f32)
        resident_spec(w1.shape), resident_spec(b1.shape),
        resident_spec(wh.shape), resident_spec(bh.shape),
        resident_spec(w3.shape), resident_spec(b3.shape),
        resident_spec(w4.shape), resident_spec(b4.shape),
    ]
    out_specs = (batch_spec(x_dim), batch_spec(z_dim), batch_spec(z_dim))
    out_shape = (
        jax.ShapeDtypeStruct((n_pad, x_dim), recon_dtype),   # recon (bf16 by default)
        jax.ShapeDtypeStruct((n_pad, z_dim), jnp.float32),   # mu
        jax.ShapeDtypeStruct((n_pad, z_dim), jnp.float32),   # log_var
    )

    flops = 2 * n_pad * (x_dim * h_dim + h_dim * head_pad + z_dim * h_dim + h_dim * x_dim)
    transcendentals = n_pad * (z_dim + x_dim)           # exp(0.5*lv) + exp(-|logits|)
    bytes_accessed = (
        sum(int(a.size) * a.dtype.itemsize for a in in_arrays)
        + n_pad * (x_dim * jnp.dtype(recon_dtype).itemsize + 2 * z_dim * 4)
    )

    recon, mu, log_var = pl.pallas_call(
        functools.partial(_vae_kernel, z_dim=z_dim),
        out_shape=out_shape,
        grid=grid,
        in_specs=in_specs,
        out_specs=out_specs,
        compiler_params=pltpu.CompilerParams(
            dimension_semantics=("parallel",),
            vmem_limit_bytes=32 * 1024 * 1024),
        cost_estimate=pl.CostEstimate(
            flops=flops,
            transcendentals=transcendentals,
            bytes_accessed=bytes_accessed),
    )(*in_arrays)

    return recon[:n], mu[:n], log_var[:n]


def init_params(key, x_dim, h_dim, z_dim):
    """Mimics nn.Linear default init (U[-1/sqrt(fan_in), 1/sqrt(fan_in)]).

    Weights are stored as [in_features, out_features] in bf16 (MXU inputs); biases f32.
    The mu/log_var heads are fused and lane-padded to a 128-wide block:
    wh[:, :z_dim] = W_mu, wh[:, z_dim:2z] = W_logvar, rest zero.
    """
    def linear(k, fan_in, fan_out):
        kw, kb = jax.random.split(k)
        bound = float(fan_in) ** -0.5
        w = jax.random.uniform(kw, (fan_in, fan_out), jnp.float32, -bound, bound)
        b = jax.random.uniform(kb, (1, fan_out), jnp.float32, -bound, bound)
        return w, b

    k1, k2, k3, k4, k5 = jax.random.split(key, 5)
    w1, b1 = linear(k1, x_dim, h_dim)        # fc1
    wmu, bmu = linear(k2, h_dim, z_dim)      # mu head
    wlv, blv = linear(k3, h_dim, z_dim)      # log_var head
    w3, b3 = linear(k4, z_dim, h_dim)        # fc3
    w4, b4 = linear(k5, h_dim, x_dim)        # fc4

    head_pad = max(128, ((2 * z_dim + 127) // 128) * 128)
    wh = (jnp.zeros((h_dim, head_pad), jnp.float32)
          .at[:, :z_dim].set(wmu)
          .at[:, z_dim:2 * z_dim].set(wlv))
    bh = (jnp.zeros((1, head_pad), jnp.float32)
          .at[:, :z_dim].set(bmu)
          .at[:, z_dim:2 * z_dim].set(blv))

    bf16 = jnp.bfloat16
    return (w1.astype(bf16), b1,
            wh.astype(bf16), bh,
            w3.astype(bf16), b3,
            w4.astype(bf16), b4)


def _reference_forward(x2d, eps, params):
    """Pure-JAX reference with the same bf16-input / f32-accumulate dots."""
    w1, b1, wh, bh, w3, b3, w4, b4 = params
    z_dim = w3.shape[0]
    bf16, f32 = jnp.bfloat16, jnp.float32
    dot = lambda a, b: jnp.dot(a.astype(bf16), b, preferred_element_type=f32)

    h = jnp.maximum(dot(x2d, w1) + b1, 0.0)
    heads = dot(h, wh) + bh
    mu = heads[:, :z_dim]
    lv = heads[:, z_dim:2 * z_dim]
    z = mu + eps * jnp.exp(0.5 * lv)
    h2 = jnp.maximum(dot(z, w3) + b3, 0.0)
    recon = jax.nn.sigmoid(dot(h2, w4) + b4)
    return recon, mu, lv


if __name__ == "__main__":
    # Shapes consistent with the module: x.view(-1, x_dim) with
    # x_dim = C*H*W = 1*16*16 = 256, h_dim = 128, z_dim = 32, batch = 8.
    N, C, H, W = 8, 1, 16, 16
    x_dim, h_dim, z_dim = C * H * W, 128, 32

    key = jax.random.PRNGKey(0)
    kx, keps, kp = jax.random.split(key, 3)

    x = jax.random.normal(kx, (N, C, H, W), dtype=jnp.float32)
    # eps for reparametrize is drawn outside the kernel (torch.randn_like equivalent)
    eps = jax.random.normal(keps, (N, z_dim), dtype=jnp.float32)
    params = init_params(kp, x_dim, h_dim, z_dim)

    fwd = jax.jit(lambda xx, ee: vae_forward(xx, ee, params))
    recon, mu, log_var = fwd(x, eps)
    jax.block_until_ready((recon, mu, log_var))

    assert recon.shape == (N, x_dim) and mu.shape == (N, z_dim) and log_var.shape == (N, z_dim)

    recon_ref, mu_ref, lv_ref = _reference_forward(x.reshape(-1, x_dim), eps, params)
    assert jnp.allclose(recon.astype(jnp.float32), recon_ref, atol=1e-2), "recon mismatch"
    assert jnp.allclose(mu, mu_ref, atol=1e-2), "mu mismatch"
    assert jnp.allclose(log_var, lv_ref, atol=1e-2), "log_var mismatch"
    assert bool(jnp.all(jnp.isfinite(recon.astype(jnp.float32)))), "non-finite recon"

    print("KERNEL_OK")
</pallas_src>

<mosaic_0001>
module attributes {stable_mosaic.version = 11 : i64} {
  func.func @_vae_kernel(%arg0: i32, %arg1: memref<128x256xbf16, #tpu.memory_space<vmem>>, %arg2: memref<128x32xf32, #tpu.memory_space<vmem>>, %arg3: memref<256x128xbf16, #tpu.memory_space<vmem>>, %arg4: memref<1x128xf32, #tpu.memory_space<vmem>>, %arg5: memref<128x128xbf16, #tpu.memory_space<vmem>>, %arg6: memref<1x128xf32, #tpu.memory_space<vmem>>, %arg7: memref<32x128xbf16, #tpu.memory_space<vmem>>, %arg8: memref<1x128xf32, #tpu.memory_space<vmem>>, %arg9: memref<128x256xbf16, #tpu.memory_space<vmem>>, %arg10: memref<1x256xf32, #tpu.memory_space<vmem>>, %arg11: memref<128x256xbf16, #tpu.memory_space<vmem>>, %arg12: memref<128x32xf32, #tpu.memory_space<vmem>>, %arg13: memref<128x32xf32, #tpu.memory_space<vmem>>) attributes {dimension_semantics = [#tpu.dimension_semantics<parallel>], iteration_bounds = array<i64: 1>, scalar_prefetch = 0 : i64, scratch_operands = 0 : i64, tpu.core_type = #tpu.core_type<tc>, window_params = [{transform_indices = @transform_0, window_bounds = array<i64: 128, 256>}, {transform_indices = @transform_1, window_bounds = array<i64: 128, 32>}, {pipeline_mode = #tpu.pipeline_mode<synchronous>, transform_indices = @transform_2, window_bounds = array<i64: 256, 128>}, {pipeline_mode = #tpu.pipeline_mode<synchronous>, transform_indices = @transform_3, window_bounds = array<i64: 1, 128>}, {pipeline_mode = #tpu.pipeline_mode<synchronous>, transform_indices = @transform_4, window_bounds = array<i64: 128, 128>}, {pipeline_mode = #tpu.pipeline_mode<synchronous>, transform_indices = @transform_5, window_bounds = array<i64: 1, 128>}, {pipeline_mode = #tpu.pipeline_mode<synchronous>, transform_indices = @transform_6, window_bounds = array<i64: 32, 128>}, {pipeline_mode = #tpu.pipeline_mode<synchronous>, transform_indices = @transform_7, window_bounds = array<i64: 1, 128>}, {pipeline_mode = #tpu.pipeline_mode<synchronous>, transform_indices = @transform_8, window_bounds = array<i64: 128, 256>}, {pipeline_mode = #tpu.pipeline_mode<synchronous>, transform_indices = @transform_9, window_bounds = array<i64: 1, 256>}, {transform_indices = @transform_10, window_bounds = array<i64: 128, 256>}, {transform_indices = @transform_11, window_bounds = array<i64: 128, 32>}, {transform_indices = @transform_12, window_bounds = array<i64: 128, 32>}]} {
    %c0 = arith.constant 0 : index
    %c0_0 = arith.constant 0 : index
    %0 = vector.load %arg1[%c0, %c0_0] : memref<128x256xbf16, #tpu.memory_space<vmem>>, vector<128x256xbf16>
    %c0_1 = arith.constant 0 : index
    %c0_2 = arith.constant 0 : index
    %1 = vector.load %arg3[%c0_1, %c0_2] : memref<256x128xbf16, #tpu.memory_space<vmem>>, vector<256x128xbf16>
    %cst = arith.constant dense<0.000000e+00> : vector<128x128xf32>
    %2 = tpu.matmul %0, %1, %cst {dimension_numbers = #tpu.dot_dimension_numbers<[1], [0], [0], [1], [0, 0, 1, 1], [], []>} : vector<128x256xbf16>, vector<256x128xbf16>, vector<128x128xf32> -> vector<128x128xf32>
    %c0_3 = arith.constant 0 : index
    %c0_4 = arith.constant 0 : index
    %3 = vector.load %arg4[%c0_3, %c0_4] : memref<1x128xf32, #tpu.memory_space<vmem>>, vector<1x128xf32>
    %4 = vector.broadcast %3 : vector<1x128xf32> to vector<128x128xf32>
    %5 = arith.addf %2, %4 : vector<128x128xf32>
    %cst_5 = arith.constant 0.000000e+00 : f32
    %6 = vector.broadcast %cst_5 : f32 to vector<128x128xf32>
    %7 = arith.maximumf %5, %6 : vector<128x128xf32>
    %8 = arith.truncf %7 : vector<128x128xf32> to vector<128x128xbf16>
    %c0_6 = arith.constant 0 : index
    %c0_7 = arith.constant 0 : index
    %9 = vector.load %arg5[%c0_6, %c0_7] : memref<128x128xbf16, #tpu.memory_space<vmem>>, vector<128x128xbf16>
    %cst_8 = arith.constant dense<0.000000e+00> : vector<128x128xf32>
    %10 = tpu.matmul %8, %9, %cst_8 {dimension_numbers = #tpu.dot_dimension_numbers<[1], [0], [0], [1], [0, 0, 1, 1], [], []>} : vector<128x128xbf16>, vector<128x128xbf16>, vector<128x128xf32> -> vector<128x128xf32>
    %c0_9 = arith.constant 0 : index
    %c0_10 = arith.constant 0 : index
    %11 = vector.load %arg6[%c0_9, %c0_10] : memref<1x128xf32, #tpu.memory_space<vmem>>, vector<1x128xf32>
    %12 = vector.broadcast %11 : vector<1x128xf32> to vector<128x128xf32>
    %13 = arith.addf %10, %12 : vector<128x128xf32>
    %14 = vector.extract_strided_slice %13 {offsets = [0, 0], sizes = [128, 32], strides = [1, 1]} : vector<128x128xf32> to vector<128x32xf32>
    %15 = vector.extract_strided_slice %13 {offsets = [0, 32], sizes = [128, 32], strides = [1, 1]} : vector<128x128xf32> to vector<128x32xf32>
    %c0_11 = arith.constant 0 : index
    %c0_12 = arith.constant 0 : index
    %16 = vector.load %arg12[%c0_11, %c0_12] : memref<128x32xf32, #tpu.memory_space<vmem>>, vector<128x32xf32>
    tpu.vector_store %arg12[%c0_11, %c0_12], %14 {strides = array<i32>} : memref<128x32xf32, #tpu.memory_space<vmem>>, vector<128x32xf32>,
    %c0_13 = arith.constant 0 : index
    %c0_14 = arith.constant 0 : index
    %17 = vector.load %arg13[%c0_13, %c0_14] : memref<128x32xf32, #tpu.memory_space<vmem>>, vector<128x32xf32>
    tpu.vector_store %arg13[%c0_13, %c0_14], %15 {strides = array<i32>} : memref<128x32xf32, #tpu.memory_space<vmem>>, vector<128x32xf32>,
    %cst_15 = arith.constant 5.000000e-01 : f32
    %18 = vector.broadcast %cst_15 : f32 to vector<128x32xf32>
    %19 = arith.mulf %18, %15 : vector<128x32xf32>
    %20 = math.exp %19 : vector<128x32xf32>
    %c0_16 = arith.constant 0 : index
    %c0_17 = arith.constant 0 : index
    %21 = vector.load %arg2[%c0_16, %c0_17] : memref<128x32xf32, #tpu.memory_space<vmem>>, vector<128x32xf32>
    %22 = arith.mulf %21, %20 : vector<128x32xf32>
    %23 = arith.addf %14, %22 : vector<128x32xf32>
    %24 = arith.truncf %23 : vector<128x32xf32> to vector<128x32xbf16>
    %c0_18 = arith.constant 0 : index
    %c0_19 = arith.constant 0 : index
    %25 = vector.load %arg7[%c0_18, %c0_19] : memref<32x128xbf16, #tpu.memory_space<vmem>>, vector<32x128xbf16>
    %cst_20 = arith.constant dense<0.000000e+00> : vector<128x128xf32>
    %26 = tpu.matmul %24, %25, %cst_20 {dimension_numbers = #tpu.dot_dimension_numbers<[1], [0], [0], [1], [0, 0, 1, 1], [], []>} : vector<128x32xbf16>, vector<32x128xbf16>, vector<128x128xf32> -> vector<128x128xf32>
    %c0_21 = arith.constant 0 : index
    %c0_22 = arith.constant 0 : index
    %27 = vector.load %arg8[%c0_21, %c0_22] : memref<1x128xf32, #tpu.memory_space<vmem>>, vector<1x128xf32>
    %28 = vector.broadcast %27 : vector<1x128xf32> to vector<128x128xf32>
    %29 = arith.addf %26, %28 : vector<128x128xf32>
    %cst_23 = arith.constant 0.000000e+00 : f32
    %30 = vector.broadcast %cst_23 : f32 to vector<128x128xf32>
    %31 = arith.maximumf %29, %30 : vector<128x128xf32>
    %32 = arith.truncf %31 : vector<128x128xf32> to vector<128x128xbf16>
    %c0_24 = arith.constant 0 : index
    %c0_25 = arith.constant 0 : index
    %33 = vector.load %arg9[%c0_24, %c0_25] : memref<128x256xbf16, #tpu.memory_space<vmem>>, vector<128x256xbf16>
    %cst_26 = arith.constant dense<0.000000e+00> : vector<128x256xf32>
    %34 = tpu.matmul %32, %33, %cst_26 {dimension_numbers = #tpu.dot_dimension_numbers<[1], [0], [0], [1], [0, 0, 1, 1], [], []>} : vector<128x128xbf16>, vector<128x256xbf16>, vector<128x256xf32> -> vector<128x256xf32>
    %c0_27 = arith.constant 0 : index
    %c0_28 = arith.constant 0 : index
    %35 = vector.load %arg10[%c0_27, %c0_28] : memref<1x256xf32, #tpu.memory_space<vmem>>, vector<1x256xf32>
    %36 = vector.broadcast %35 : vector<1x256xf32> to vector<128x256xf32>
    %37 = arith.addf %34, %36 : vector<128x256xf32>
    %38 = math.absf %37 : vector<128x256xf32>
    %cst_29 = arith.constant 0.000000e+00 : f32
    %39 = vector.broadcast %cst_29 : f32 to vector<128x256xf32>
    %40 = arith.subf %39, %38 : vector<128x256xf32>
    %41 = math.exp %40 : vector<128x256xf32>
    %cst_30 = arith.constant 1.000000e+00 : f32
    %42 = vector.broadcast %cst_30 : f32 to vector<128x256xf32>
    %43 = arith.addf %42, %41 : vector<128x256xf32>
    %44 = tpu.reciprocal %43 : vector<128x256xf32> -> vector<128x256xf32>
    %cst_31 = arith.constant 0.000000e+00 : f32
    %45 = vector.broadcast %cst_31 : f32 to vector<128x256xf32>
    %46 = arith.cmpf oge, %37, %45 : vector<128x256xf32>
    %47 = arith.mulf %41, %44 : vector<128x256xf32>
    %48 = arith.select %46, %44, %47 : vector<128x256xi1>, vector<128x256xf32>
    %49 = arith.truncf %48 : vector<128x256xf32> to vector<128x256xbf16>
    %c0_32 = arith.constant 0 : index
    %c0_33 = arith.constant 0 : index
    %50 = vector.load %arg11[%c0_32, %c0_33] : memref<128x256xbf16, #tpu.memory_space<vmem>>, vector<128x256xbf16>
    tpu.vector_store %arg11[%c0_32, %c0_33], %49 {strides = array<i32>} : memref<128x256xbf16, #tpu.memory_space<vmem>>, vector<128x256xbf16>,
    return
  }
  func.func @transform_0(%arg0: i32) -> (i32, i32) {
    %c0_i32 = arith.constant 0 : i32
    %c0_i32_0 = arith.constant 0 : i32
    return %arg0, %c0_i32 : i32, i32
  }
  func.func @transform_1(%arg0: i32) -> (i32, i32) {
    %c0_i32 = arith.constant 0 : i32
    %c0_i32_0 = arith.constant 0 : i32
    return %arg0, %c0_i32 : i32, i32
  }
  func.func @transform_2(%arg0: i32) -> (i32, i32) {
    %c0_i32 = arith.constant 0 : i32
    %c0_i32_0 = arith.constant 0 : i32
    %c0_i32_1 = arith.constant 0 : i32
    return %c0_i32, %c0_i32_0 : i32, i32
  }
  func.func @transform_3(%arg0: i32) -> (i32, i32) {
    %c0_i32 = arith.constant 0 : i32
    %c0_i32_0 = arith.constant 0 : i32
    %c0_i32_1 = arith.constant 0 : i32
    return %c0_i32, %c0_i32_0 : i32, i32
  }
  func.func @transform_4(%arg0: i32) -> (i32, i32) {
    %c0_i32 = arith.constant 0 : i32
    %c0_i32_0 = arith.constant 0 : i32
    %c0_i32_1 = arith.constant 0 : i32
    return %c0_i32, %c0_i32_0 : i32, i32
  }
  func.func @transform_5(%arg0: i32) -> (i32, i32) {
    %c0_i32 = arith.constant 0 : i32
    %c0_i32_0 = arith.constant 0 : i32
    %c0_i32_1 = arith.constant 0 : i32
    return %c0_i32, %c0_i32_0 : i32, i32
  }
  func.func @transform_6(%arg0: i32) -> (i32, i32) {
    %c0_i32 = arith.constant 0 : i32
    %c0_i32_0 = arith.constant 0 : i32
    %c0_i32_1 = arith.constant 0 : i32
    return %c0_i32, %c0_i32_0 : i32, i32
  }
  func.func @transform_7(%arg0: i32) -> (i32, i32) {
    %c0_i32 = arith.constant 0 : i32
    %c0_i32_0 = arith.constant 0 : i32
    %c0_i32_1 = arith.constant 0 : i32
    return %c0_i32, %c0_i32_0 : i32, i32
  }
  func.func @transform_8(%arg0: i32) -> (i32, i32) {
    %c0_i32 = arith.constant 0 : i32
    %c0_i32_0 = arith.constant 0 : i32
    %c0_i32_1 = arith.constant 0 : i32
    return %c0_i32, %c0_i32_0 : i32, i32
  }
  func.func @transform_9(%arg0: i32) -> (i32, i32) {
    %c0_i32 = arith.constant 0 : i32
    %c0_i32_0 = arith.constant 0 : i32
    %c0_i32_1 = arith.constant 0 : i32
    return %c0_i32, %c0_i32_0 : i32, i32
  }
  func.func @transform_10(%arg0: i32) -> (i32, i32) {
    %c0_i32 = arith.constant 0 : i32
    %c0_i32_0 = arith.constant 0 : i32
    return %arg0, %c0_i32 : i32, i32
  }
  func.func @transform_11(%arg0: i32) -> (i32, i32) {
    %c0_i32 = arith.constant 0 : i32
    %c0_i32_0 = arith.constant 0 : i32
    return %arg0, %c0_i32 : i32, i32
  }
  func.func @transform_12(%arg0: i32) -> (i32, i32) {
    %c0_i32 = arith.constant 0 : i32
    %c0_i32_0 = arith.constant 0 : i32
    return %arg0, %c0_i32 : i32, i32
  }
}

</mosaic_0001>

<llo_original>
// kernel: _lambda_.1
$region0: #{_lambda_.1}
  #allocation0 [shape = 'u32[]', space=smem, size = 0x4, offset = 0x4, fixed_abs, tag = 'smem constant byte address 0x4 - core index']
  #allocation1 [shape = 'u32[144,128]{1,0:T(1,128)}', space=vmem, size = 0x12000, scoped, tag = 'internal scratch']
  %s0 = inlined_call_operand.vmem [shape: bf16[128,256], index: 0, kind: input, shape index: {}]
  %s1 = inlined_call_operand.vmem [shape: f32[128,32], index: 1, kind: input, shape index: {}]
  %s2 = inlined_call_operand.vmem [shape: bf16[256,128], index: 2, kind: input, shape index: {}]
  %s3 = inlined_call_operand.vmem [shape: f32[1,128], index: 3, kind: input, shape index: {}]
  %s4 = inlined_call_operand.vmem [shape: bf16[128,128], index: 4, kind: input, shape index: {}]
  %s5 = inlined_call_operand.vmem [shape: f32[1,128], index: 5, kind: input, shape index: {}]
  %s6 = inlined_call_operand.vmem [shape: bf16[32,128], index: 6, kind: input, shape index: {}]
  %s7 = inlined_call_operand.vmem [shape: f32[1,128], index: 7, kind: input, shape index: {}]
  %s8 = inlined_call_operand.vmem [shape: bf16[128,256], index: 8, kind: input, shape index: {}]
  %s9 = inlined_call_operand.vmem [shape: f32[1,256], index: 9, kind: input, shape index: {}]
  %s10 = inlined_call_operand.vmem [shape: bf16[128,256], index: 10, kind: output, shape index: {0}]
  %s11 = inlined_call_operand.vmem [shape: f32[128,32], index: 11, kind: output, shape index: {1}]
  %s12 = inlined_call_operand.vmem [shape: f32[128,32], index: 12, kind: output, shape index: {2}]
  %13 = xla_tuple %s10, %s11, %s12
  %s14 = sld [smem:[#allocation0]]
  $region66: #{_lambda_.1} parent=0
    _
  %s16 = ssub.s32 1, %s14
  %s17 = scalar_select 0, %s16, %s14
  // Predicated region
  $region2: #{_lambda_.1} parent=0 // pred_check
    _
  $region3: #{_lambda_.1} parent=0 // pred_check_branch
    %19 = sbr.rel (0) target = $region5
  $region4: #{_lambda_.1} parent=0 // pred_region
    _
  $region5: #{_lambda_.1} parent=0 // pred_fallthru
    _
  // Predicated region
  $region6: #{_lambda_.1} parent=0 // pred_check
    _
  $region7: #{_lambda_.1} parent=0 // pred_check_branch
    %21 = sbr.rel (0) target = $region9
  $region8: #{_lambda_.1} parent=0 // pred_region
    _
  $region9: #{_lambda_.1} parent=0 // pred_fallthru
    _
  // Predicated region
  $region10: #{_lambda_.1} parent=0 // pred_check
    _
  $region11: #{_lambda_.1} parent=0 // pred_check_branch
    %23 = sbr.rel (0) target = $region13
  $region12: #{_lambda_.1} parent=0 // pred_region
    _
  $region13: #{_lambda_.1} parent=0 // pred_fallthru
    _
  // Predicated region
  $region14: #{_lambda_.1} parent=0 // pred_check
    _
  $region15: #{_lambda_.1} parent=0 // pred_check_branch
    %25 = sbr.rel (0) target = $region17
  $region16: #{_lambda_.1} parent=0 // pred_region
    _
  $region17: #{_lambda_.1} parent=0 // pred_fallthru
    _
  // Predicated region
  $region18: #{_lambda_.1} parent=0 // pred_check
    _
  $region19: #{_lambda_.1} parent=0 // pred_check_branch
    %27 = sbr.rel (0) target = $region21
  $region20: #{_lambda_.1} parent=0 // pred_region
    _
  $region21: #{_lambda_.1} parent=0 // pred_fallthru
    _
  // Predicated region
  $region22: #{_lambda_.1} parent=0 // pred_check
    _
  $region23: #{_lambda_.1} parent=0 // pred_check_branch
    %29 = sbr.rel (0) target = $region25
  $region24: #{_lambda_.1} parent=0 // pred_region
    _
  $region25: #{_lambda_.1} parent=0 // pred_fallthru
    _
  // Predicated region
  $region26: #{_lambda_.1} parent=0 // pred_check
    _
  $region27: #{_lambda_.1} parent=0 // pred_check_branch
    %31 = sbr.rel (0) target = $region29
  $region28: #{_lambda_.1} parent=0 // pred_region
    _
  $region29: #{_lambda_.1} parent=0 // pred_fallthru
    _
  // Predicated region
  $region30: #{_lambda_.1} parent=0 // pred_check
    _
  $region31: #{_lambda_.1} parent=0 // pred_check_branch
    %33 = sbr.rel (0) target = $region33
  $region32: #{_lambda_.1} parent=0 // pred_region
    _
  $region33: #{_lambda_.1} parent=0 // pred_fallthru
    _
  // Predicated region
  $region34: #{_lambda_.1} parent=0 // pred_check
    _
  $region35: #{_lambda_.1} parent=0 // pred_check_branch
    %35 = sbr.rel (0) target = $region37
  $region36: #{_lambda_.1} parent=0 // pred_region
    _
  $region37: #{_lambda_.1} parent=0 // pred_fallthru
    _
  // Predicated region
  $region38: #{_lambda_.1} parent=0 // pred_check
    _
  $region39: #{_lambda_.1} parent=0 // pred_check_branch
    %37 = sbr.rel (0) target = $region41
  $region40: #{_lambda_.1} parent=0 // pred_region
    _
  $region41: #{_lambda_.1} parent=0 // pred_fallthru
    _
  %v39 = vld [vmem:[%s0] sm:$0xff]
  %v40 = vld [vmem:[%s0 + $0x8] sm:$0xff]
  %v41 = vld [vmem:[%s0 + $0x10] sm:$0xff]
  %v42 = vld [vmem:[%s0 + $0x18] sm:$0xff]
  %v43 = vld [vmem:[%s0 + $0x20] sm:$0xff]
  %v44 = vld [vmem:[%s0 + $0x28] sm:$0xff]
  %v45 = vld [vmem:[%s0 + $0x30] sm:$0xff]
  %v46 = vld [vmem:[%s0 + $0x38] sm:$0xff]
  %v47 = vld [vmem:[%s0 + $0x40] sm:$0xff]
  %v48 = vld [vmem:[%s0 + $0x48] sm:$0xff]
  %v49 = vld [vmem:[%s0 + $0x50] sm:$0xff]
  %v50 = vld [vmem:[%s0 + $0x58] sm:$0xff]
  %v51 = vld [vmem:[%s0 + $0x60] sm:$0xff]
  %v52 = vld [vmem:[%s0 + $0x68] sm:$0xff]
  %v53 = vld [vmem:[%s0 + $0x70] sm:$0xff]
  %v54 = vld [vmem:[%s0 + $0x78] sm:$0xff]
  %v55 = vld [vmem:[%s2] sm:$0xf]
  %v56 = vld [vmem:[%s2 + $0x4] sm:$0xf]
  %v57 = vld [vmem:[%s2 + $0x8] sm:$0xf]
  %v58 = vld [vmem:[%s2 + $0xc] sm:$0xf]
  %v59 = vld [vmem:[%s2 + $0x10] sm:$0xf]
  %v60 = vld [vmem:[%s2 + $0x14] sm:$0xf]
  %v61 = vld [vmem:[%s2 + $0x18] sm:$0xf]
  %v62 = vld [vmem:[%s2 + $0x1c] sm:$0xf]
  %v63 = vld [vmem:[%s2 + $0x20] sm:$0xf]
  %v64 = vld [vmem:[%s2 + $0x24] sm:$0xf]
  %v65 = vld [vmem:[%s2 + $0x28] sm:$0xf]
  %v66 = vld [vmem:[%s2 + $0x2c] sm:$0xf]
  %v67 = vld [vmem:[%s2 + $0x30] sm:$0xf]
  %v68 = vld [vmem:[%s2 + $0x34] sm:$0xf]
  %v69 = vld [vmem:[%s2 + $0x38] sm:$0xf]
  %v70 = vld [vmem:[%s2 + $0x3c] sm:$0xf]
  %v71 = vld [vmem:[%s2 + $0x40] sm:$0xf]
  %v72 = vld [vmem:[%s2 + $0x44] sm:$0xf]
  %v73 = vld [vmem:[%s2 + $0x48] sm:$0xf]
  %v74 = vld [vmem:[%s2 + $0x4c] sm:$0xf]
  %v75 = vld [vmem:[%s2 + $0x50] sm:$0xf]
  %v76 = vld [vmem:[%s2 + $0x54] sm:$0xf]
  %v77 = vld [vmem:[%s2 + $0x58] sm:$0xf]
  %v78 = vld [vmem:[%s2 + $0x5c] sm:$0xf]
  %v79 = vld [vmem:[%s2 + $0x60] sm:$0xf]
  %v80 = vld [vmem:[%s2 + $0x64] sm:$0xf]
  %v81 = vld [vmem:[%s2 + $0x68] sm:$0xf]
  %v82 = vld [vmem:[%s2 + $0x6c] sm:$0xf]
  %v83 = vld [vmem:[%s2 + $0x70] sm:$0xf]
  %v84 = vld [vmem:[%s2 + $0x74] sm:$0xf]
  %v85 = vld [vmem:[%s2 + $0x78] sm:$0xf]
  %v86 = vld [vmem:[%s2 + $0x7c] sm:$0xf]
  %v87 = vld [vmem:[%s3] sm:$0x1]
  %v89 = vlaneseq
  %v90 = vshrl.u32 %v89, 7
  %v91 = vsub.s32 0, %v90
  %v92 = vrot.slane %v87, %v91
  %v110 = vunpack.c.l.b16 %v39
  %v111 = vunpack.c.h.b16 %v39
  %v112 = vunpack.c.l.b16 %v40
  %v113 = vunpack.c.h.b16 %v40
  %v114 = vunpack.c.l.b16 %v41
  %v115 = vunpack.c.h.b16 %v41
  %v116 = vunpack.c.l.b16 %v42
  %v117 = vunpack.c.h.b16 %v42
  %v118 = vunpack.c.l.b16 %v43
  %v119 = vunpack.c.h.b16 %v43
  %v120 = vunpack.c.l.b16 %v44
  %v121 = vunpack.c.h.b16 %v44
  %v122 = vunpack.c.l.b16 %v45
  %v123 = vunpack.c.h.b16 %v45
  %v124 = vunpack.c.l.b16 %v46
  %v125 = vunpack.c.h.b16 %v46
  %v126 = vunpack.c.l.b16 %v47
  %v127 = vunpack.c.h.b16 %v47
  %v128 = vunpack.c.l.b16 %v48
  %v129 = vunpack.c.h.b16 %v48
  %v130 = vunpack.c.l.b16 %v49
  %v131 = vunpack.c.h.b16 %v49
  %v132 = vunpack.c.l.b16 %v50
  %v133 = vunpack.c.h.b16 %v50
  %v134 = vunpack.c.l.b16 %v51
  %v135 = vunpack.c.h.b16 %v51
  %v136 = vunpack.c.l.b16 %v52
  %v137 = vunpack.c.h.b16 %v52
  %v138 = vunpack.c.l.b16 %v53
  %v139 = vunpack.c.h.b16 %v53
  %v140 = vunpack.c.l.b16 %v54
  %v141 = vunpack.c.h.b16 %v54
  %v142 = vpack.c.b16 %v112, %v110
  %v143 = vpack.c.b16 %v113, %v111
  %v144 = vpack.c.b16 %v116, %v114
  %v145 = vpack.c.b16 %v117, %v115
  %v146 = vpack.c.b16 %v120, %v118
  %v147 = vpack.c.b16 %v121, %v119
  %v148 = vpack.c.b16 %v124, %v122
  %v149 = vpack.c.b16 %v125, %v123
  %v150 = vpack.c.b16 %v128, %v126
  %v151 = vpack.c.b16 %v129, %v127
  %v152 = vpack.c.b16 %v132, %v130
  %v153 = vpack.c.b16 %v133, %v131
  %v154 = vpack.c.b16 %v136, %v134
  %v155 = vpack.c.b16 %v137, %v135
  %v156 = vpack.c.b16 %v140, %v138
  %v157 = vpack.c.b16 %v141, %v139
  %v206 = vunpack.c.l.b16 %v55
  %v207 = vunpack.c.l.b16 %v56
  %v208 = vunpack.c.l.b16 %v57
  %v209 = vunpack.c.l.b16 %v58
  %v210 = vunpack.c.l.b16 %v59
  %v211 = vunpack.c.l.b16 %v60
  %v212 = vunpack.c.l.b16 %v61
  %v213 = vunpack.c.l.b16 %v62
  %v214 = vunpack.c.l.b16 %v63
  %v215 = vunpack.c.l.b16 %v64
  %v216 = vunpack.c.l.b16 %v65
  %v217 = vunpack.c.l.b16 %v66
  %v218 = vunpack.c.l.b16 %v67
  %v219 = vunpack.c.l.b16 %v68
  %v220 = vunpack.c.l.b16 %v69
  %v221 = vunpack.c.l.b16 %v70
  %v222 = vunpack.c.l.b16 %v71
  %v223 = vunpack.c.l.b16 %v72
  %v224 = vunpack.c.l.b16 %v73
  %v225 = vunpack.c.l.b16 %v74
  %v226 = vunpack.c.l.b16 %v75
  %v227 = vunpack.c.l.b16 %v76
  %v228 = vunpack.c.l.b16 %v77
  %v229 = vunpack.c.l.b16 %v78
  %v230 = vunpack.c.l.b16 %v79
  %v231 = vunpack.c.l.b16 %v80
  %v232 = vunpack.c.l.b16 %v81
  %v233 = vunpack.c.l.b16 %v82
  %v234 = vunpack.c.l.b16 %v83
  %v235 = vunpack.c.l.b16 %v84
  %v236 = vunpack.c.l.b16 %v85
  %v237 = vunpack.c.l.b16 %v86
  %v238 = vpack.c.b16 %v207, %v206
  %v239 = vpack.c.b16 %v209, %v208
  %v240 = vpack.c.b16 %v211, %v210
  %v241 = vpack.c.b16 %v213, %v212
  %v242 = vpack.c.b16 %v215, %v214
  %v243 = vpack.c.b16 %v217, %v216
  %v244 = vpack.c.b16 %v219, %v218
  %v245 = vpack.c.b16 %v221, %v220
  %v246 = vpack.c.b16 %v223, %v222
  %v247 = vpack.c.b16 %v225, %v224
  %v248 = vpack.c.b16 %v227, %v226
  %v249 = vpack.c.b16 %v229, %v228
  %v250 = vpack.c.b16 %v231, %v230
  %v251 = vpack.c.b16 %v233, %v232
  %v252 = vpack.c.b16 %v235, %v234
  %v253 = vpack.c.b16 %v237, %v236
  %270 = vmatprep.subr.bf16.mxu0 0
  %271 = vmatpush1.bf16.msra.mxu0 %v238
  %272 = vmatprep.subr.bf16.mxu0 0
  %273 = vmatpush1.bf16.msra.mxu0 %v239
  %274 = vmatprep.subr.bf16.mxu0 0
  %275 = vmatpush1.bf16.msra.mxu0 %v240
  %276 = vmatprep.subr.bf16.mxu0 0
  %277 = vmatpush1.bf16.msra.mxu0 %v241
  %278 = vmatprep.subr.bf16.mxu0 0
  %279 = vmatpush1.bf16.msra.mxu0 %v242
  %280 = vmatprep.subr.bf16.mxu0 0
  %281 = vmatpush1.bf16.msra.mxu0 %v243
  %282 = vmatprep.subr.bf16.mxu0 0
  %283 = vmatpush1.bf16.msra.mxu0 %v244
  %284 = vmatprep.subr.bf16.mxu0 0
  %285 = vmatpush1.bf16.msra.mxu0 %v245
  %286 = vmatprep.subr.bf16.mxu0 0
  %287 = vmatpush1.bf16.msra.mxu0 %v246
  %288 = vmatprep.subr.bf16.mxu0 0
  %289 = vmatpush1.bf16.msra.mxu0 %v247
  %290 = vmatprep.subr.bf16.mxu0 0
  %291 = vmatpush1.bf16.msra.mxu0 %v248
  %292 = vmatprep.subr.bf16.mxu0 0
  %293 = vmatpush1.bf16.msra.mxu0 %v249
  %294 = vmatprep.subr.bf16.mxu0 0
  %295 = vmatpush1.bf16.msra.mxu0 %v250
  %296 = vmatprep.subr.bf16.mxu0 0
  %297 = vmatpush1.bf16.msra.mxu0 %v251
  %298 = vmatprep.subr.bf16.mxu0 0
  %299 = vmatpush1.bf16.msra.mxu0 %v252
  %300 = vmatprep.subr.bf16.mxu0 0
  %301 = vmatpush1.bf16.msra.mxu0 %v253
  %302 = vmatprep.mubr.bf16.mxu0 %v143
  %303 = vmatmul.mubr.bf16.gmra.mrb[0].mxu0 %v142
  %v304 = vpop.f32.mrb[0].mxu0
  %v305 = vadd.f32 %v92, %v304
  %v306 = vpop.f32.mrb[0].mxu0
  %v307 = vpop.f32.mrb[0].mxu0
  %v308 = vadd.f32 %v92, %v307
  %v309 = vpop.f32.mrb[0].mxu0
  %310 = vmatprep.mubr.bf16.mxu0 %v145
  %311 = vmatmul.mubr.bf16.gmra.mrb[0].mxu0 %v144
  %v312 = vpop.f32.mrb[0].mxu0
  %v313 = vadd.f32 %v92, %v312
  %v314 = vpop.f32.mrb[0].mxu0
  %v315 = vpop.f32.mrb[0].mxu0
  %v316 = vadd.f32 %v92, %v315
  %v317 = vpop.f32.mrb[0].mxu0
  %318 = vmatprep.mubr.bf16.mxu0 %v147
  %319 = vmatmul.mubr.bf16.gmra.mrb[0].mxu0 %v146
  %v320 = vpop.f32.mrb[0].mxu0
  %v321 = vadd.f32 %v92, %v320
  %v322 = vpop.f32.mrb[0].mxu0
  %v323 = vpop.f32.mrb[0].mxu0
  %v324 = vadd.f32 %v92, %v323
  %v325 = vpop.f32.mrb[0].mxu0
  %326 = vmatprep.mubr.bf16.mxu0 %v149
  %327 = vmatmul.mubr.bf16.gmra.mrb[0].mxu0 %v148
  %v328 = vpop.f32.mrb[0].mxu0
  %v329 = vadd.f32 %v92, %v328
  %v330 = vpop.f32.mrb[0].mxu0
  %v331 = vpop.f32.mrb[0].mxu0
  %v332 = vadd.f32 %v92, %v331
  %v333 = vpop.f32.mrb[0].mxu0
  %334 = vmatprep.mubr.bf16.mxu0 %v151
  %335 = vmatmul.mubr.bf16.gmra.mrb[0].mxu0 %v150
  %v336 = vpop.f32.mrb[0].mxu0
  %v337 = vadd.f32 %v92, %v336
  %v338 = vpop.f32.mrb[0].mxu0
  %v339 = vpop.f32.mrb[0].mxu0
  %v340 = vadd.f32 %v92, %v339
  %v341 = vpop.f32.mrb[0].mxu0
  %342 = vmatprep.mubr.bf16.mxu0 %v153
  %343 = vmatmul.mubr.bf16.gmra.mrb[0].mxu0 %v152
  %v344 = vpop.f32.mrb[0].mxu0
  %v345 = vadd.f32 %v92, %v344
  %v346 = vpop.f32.mrb[0].mxu0
  %v347 = vpop.f32.mrb[0].mxu0
  %v348 = vadd.f32 %v92, %v347
  %v349 = vpop.f32.mrb[0].mxu0
  %350 = vmatprep.mubr.bf16.mxu0 %v155
  %351 = vmatmul.mubr.bf16.gmra.mrb[0].mxu0 %v154
  %v352 = vpop.f32.mrb[0].mxu0
  %v353 = vadd.f32 %v92, %v352
  %v354 = vpop.f32.mrb[0].mxu0
  %v355 = vpop.f32.mrb[0].mxu0
  %v356 = vadd.f32 %v92, %v355
  %v357 = vpop.f32.mrb[0].mxu0
  %358 = vmatprep.mubr.bf16.mxu0 %v157
  %359 = vmatmul.mubr.bf16.gmra.mrb[0].mxu0 %v156
  %v360 = vpop.f32.mrb[0].mxu0
  %v361 = vadd.f32 %v92, %v360
  %v362 = vpop.f32.mrb[0].mxu0
  %v363 = vpop.f32.mrb[0].mxu0
  %v364 = vadd.f32 %v92, %v363
  %v365 = vpop.f32.mrb[0].mxu0
  %366 = vdwg.mxu0
  %v367 = vmax.f32 %v305, 0.0
  %v368 = vmax.f32 %v308, 0.0
  %v369 = vmax.f32 %v313, 0.0
  %v370 = vmax.f32 %v316, 0.0
  %v371 = vmax.f32 %v321, 0.0
  %v372 = vmax.f32 %v324, 0.0
  %v373 = vmax.f32 %v329, 0.0
  %v374 = vmax.f32 %v332, 0.0
  %v375 = vmax.f32 %v337, 0.0
  %v376 = vmax.f32 %v340, 0.0
  %v377 = vmax.f32 %v345, 0.0
  %v378 = vmax.f32 %v348, 0.0
  %v379 = vmax.f32 %v353, 0.0
  %v380 = vmax.f32 %v356, 0.0
  %v381 = vmax.f32 %v361, 0.0
  %v382 = vmax.f32 %v364, 0.0
  %v383 = vpack.c.bf16 %v368, %v367
  %v384 = vpack.c.bf16 %v370, %v369
  %v385 = vpack.c.bf16 %v372, %v371
  %v386 = vpack.c.bf16 %v374, %v373
  %v387 = vpack.c.bf16 %v376, %v375
  %v388 = vpack.c.bf16 %v378, %v377
  %v389 = vpack.c.bf16 %v380, %v379
  %v390 = vpack.c.bf16 %v382, %v381
  %v391 = vld [vmem:[%s4] sm:$0xf]
  %v392 = vld [vmem:[%s4 + $0x4] sm:$0xf]
  %v393 = vld [vmem:[%s4 + $0x8] sm:$0xf]
  %v394 = vld [vmem:[%s4 + $0xc] sm:$0xf]
  %v395 = vld [vmem:[%s4 + $0x10] sm:$0xf]
  %v396 = vld [vmem:[%s4 + $0x14] sm:$0xf]
  %v397 = vld [vmem:[%s4 + $0x18] sm:$0xf]
  %v398 = vld [vmem:[%s4 + $0x1c] sm:$0xf]
  %v399 = vld [vmem:[%s4 + $0x20] sm:$0xf]
  %v400 = vld [vmem:[%s4 + $0x24] sm:$0xf]
  %v401 = vld [vmem:[%s4 + $0x28] sm:$0xf]
  %v402 = vld [vmem:[%s4 + $0x2c] sm:$0xf]
  %v403 = vld [vmem:[%s4 + $0x30] sm:$0xf]
  %v404 = vld [vmem:[%s4 + $0x34] sm:$0xf]
  %v405 = vld [vmem:[%s4 + $0x38] sm:$0xf]
  %v406 = vld [vmem:[%s4 + $0x3c] sm:$0xf]
  %v407 = vld [vmem:[%s5] sm:$0x1]
  %v409 = vlaneseq
  %v410 = vshrl.u32 %v409, 7
  %v411 = vsub.s32 0, %v410
  %v412 = vrot.slane %v407, %v411
  %v430 = vunpack.c.l.b16 %v391
  %v431 = vunpack.c.l.b16 %v392
  %v432 = vunpack.c.l.b16 %v393
  %v433 = vunpack.c.l.b16 %v394
  %v434 = vunpack.c.l.b16 %v395
  %v435 = vunpack.c.l.b16 %v396
  %v436 = vunpack.c.l.b16 %v397
  %v437 = vunpack.c.l.b16 %v398
  %v438 = vunpack.c.l.b16 %v399
  %v439 = vunpack.c.l.b16 %v400
  %v440 = vunpack.c.l.b16 %v401
  %v441 = vunpack.c.l.b16 %v402
  %v442 = vunpack.c.l.b16 %v403
  %v443 = vunpack.c.l.b16 %v404
  %v444 = vunpack.c.l.b16 %v405
  %v445 = vunpack.c.l.b16 %v406
  %v446 = vpack.c.b16 %v431, %v430
  %v447 = vpack.c.b16 %v433, %v432
  %v448 = vpack.c.b16 %v435, %v434
  %v449 = vpack.c.b16 %v437, %v436
  %v450 = vpack.c.b16 %v439, %v438
  %v451 = vpack.c.b16 %v441, %v440
  %v452 = vpack.c.b16 %v443, %v442
  %v453 = vpack.c.b16 %v445, %v444
  %462 = vmatprep.subr.bf16.mxu0 0
  %463 = vmatpush1.bf16.msra.mxu0 %v446
  %464 = vmatprep.subr.bf16.mxu0 0
  %465 = vmatpush1.bf16.msra.mxu0 %v447
  %466 = vmatprep.subr.bf16.mxu0 0
  %467 = vmatpush1.bf16.msra.mxu0 %v448
  %468 = vmatprep.subr.bf16.mxu0 0
  %469 = vmatpush1.bf16.msra.mxu0 %v449
  %470 = vmatprep.subr.bf16.mxu0 0
  %471 = vmatpush1.bf16.msra.mxu0 %v450
  %472 = vmatprep.subr.bf16.mxu0 0
  %473 = vmatpush1.bf16.msra.mxu0 %v451
  %474 = vmatprep.subr.bf16.mxu0 0
  %475 = vmatpush1.bf16.msra.mxu0 %v452
  %476 = vmatprep.subr.bf16.mxu0 0
  %477 = vmatpush1.bf16.msra.mxu0 %v453
  %478 = vmatprep.subr.bf16.mxu0 0
  %479 = vmatpush1.bf16.msra.mxu0 0
  %480 = vmatprep.subr.bf16.mxu0 0
  %481 = vmatpush1.bf16.msra.mxu0 0
  %482 = vmatprep.subr.bf16.mxu0 0
  %483 = vmatpush1.bf16.msra.mxu0 0
  %484 = vmatprep.subr.bf16.mxu0 0
  %485 = vmatpush1.bf16.msra.mxu0 0
  %486 = vmatprep.subr.bf16.mxu0 0
  %487 = vmatpush1.bf16.msra.mxu0 0
  %488 = vmatprep.subr.bf16.mxu0 0
  %489 = vmatpush1.bf16.msra.mxu0 0
  %490 = vmatprep.subr.bf16.mxu0 0
  %491 = vmatpush1.bf16.msra.mxu0 0
  %492 = vmatprep.subr.bf16.mxu0 0
  %493 = vmatpush1.bf16.msra.mxu0 0
  %494 = vmatprep.mubr.bf16.mxu0 0
  %495 = vmatmul.mubr.bf16.gmra.mrb[0].mxu0 %v383
  %v496 = vpop.f32.mrb[0].mxu0
  %v497 = vadd.f32 %v412, %v496
  %v498 = vpop.f32.mrb[0].mxu0
  %v499 = vpop.f32.mrb[0].mxu0
  %v500 = vadd.f32 %v412, %v499
  %v501 = vpop.f32.mrb[0].mxu0
  %502 = vmatprep.mubr.bf16.mxu0 0
  %503 = vmatmul.mubr.bf16.gmra.mrb[0].mxu0 %v384
  %v504 = vpop.f32.mrb[0].mxu0
  %v505 = vadd.f32 %v412, %v504
  %v506 = vpop.f32.mrb[0].mxu0
  %v507 = vpop.f32.mrb[0].mxu0
  %v508 = vadd.f32 %v412, %v507
  %v509 = vpop.f32.mrb[0].mxu0
  %510 = vmatprep.mubr.bf16.mxu0 0
  %511 = vmatmul.mubr.bf16.gmra.mrb[0].mxu0 %v385
  %v512 = vpop.f32.mrb[0].mxu0
  %v513 = vadd.f32 %v412, %v512
  %v514 = vpop.f32.mrb[0].mxu0
  %v515 = vpop.f32.mrb[0].mxu0
  %v516 = vadd.f32 %v412, %v515
  %v517 = vpop.f32.mrb[0].mxu0
  %518 = vmatprep.mubr.bf16.mxu0 0
  %519 = vmatmul.mubr.bf16.gmra.mrb[0].mxu0 %v386
  %v520 = vpop.f32.mrb[0].mxu0
  %v521 = vadd.f32 %v412, %v520
  %v522 = vpop.f32.mrb[0].mxu0
  %v523 = vpop.f32.mrb[0].mxu0
  %v524 = vadd.f32 %v412, %v523
  %v525 = vpop.f32.mrb[0].mxu0
  %526 = vmatprep.mubr.bf16.mxu0 0
  %527 = vmatmul.mubr.bf16.gmra.mrb[0].mxu0 %v387
  %v528 = vpop.f32.mrb[0].mxu0
  %v529 = vadd.f32 %v412, %v528
  %v530 = vpop.f32.mrb[0].mxu0
  %v531 = vpop.f32.mrb[0].mxu0
  %v532 = vadd.f32 %v412, %v531
  %v533 = vpop.f32.mrb[0].mxu0
  %534 = vmatprep.mubr.bf16.mxu0 0
  %535 = vmatmul.mubr.bf16.gmra.mrb[0].mxu0 %v388
  %v536 = vpop.f32.mrb[0].mxu0
  %v537 = vadd.f32 %v412, %v536
  %v538 = vpop.f32.mrb[0].mxu0
  %v539 = vpop.f32.mrb[0].mxu0
  %v540 = vadd.f32 %v412, %v539
  %v541 = vpop.f32.mrb[0].mxu0
  %542 = vmatprep.mubr.bf16.mxu0 0
  %543 = vmatmul.mubr.bf16.gmra.mrb[0].mxu0 %v389
  %v544 = vpop.f32.mrb[0].mxu0
  %v545 = vadd.f32 %v412, %v544
  %v546 = vpop.f32.mrb[0].mxu0
  %v547 = vpop.f32.mrb[0].mxu0
  %v548 = vadd.f32 %v412, %v547
  %v549 = vpop.f32.mrb[0].mxu0
  %550 = vmatprep.mubr.bf16.mxu0 0
  %551 = vmatmul.mubr.bf16.gmra.mrb[0].mxu0 %v390
  %v552 = vpop.f32.mrb[0].mxu0
  %v553 = vadd.f32 %v412, %v552
  %v554 = vpop.f32.mrb[0].mxu0
  %v555 = vpop.f32.mrb[0].mxu0
  %v556 = vadd.f32 %v412, %v555
  %v557 = vpop.f32.mrb[0].mxu0
  %558 = vdwg.mxu0
  %vm559 = vcmask 261120
  %560 = vst.msk [vmem:[%s11] sm:$0xff] %vm559, %v497
  %561 = vst.msk [vmem:[%s11 + $0x8] sm:$0xff] %vm559, %v500
  %562 = vst.msk [vmem:[%s11 + $0x10] sm:$0xff] %vm559, %v505
  %563 = vst.msk [vmem:[%s11 + $0x18] sm:$0xff] %vm559, %v508
  %564 = vst.msk [vmem:[%s11 + $0x20] sm:$0xff] %vm559, %v513
  %565 = vst.msk [vmem:[%s11 + $0x28] sm:$0xff] %vm559, %v516
  %566 = vst.msk [vmem:[%s11 + $0x30] sm:$0xff] %vm559, %v521
  %567 = vst.msk [vmem:[%s11 + $0x38] sm:$0xff] %vm559, %v524
  %568 = vst.msk [vmem:[%s11 + $0x40] sm:$0xff] %vm559, %v529
  %569 = vst.msk [vmem:[%s11 + $0x48] sm:$0xff] %vm559, %v532
  %570 = vst.msk [vmem:[%s11 + $0x50] sm:$0xff] %vm559, %v537
  %571 = vst.msk [vmem:[%s11 + $0x58] sm:$0xff] %vm559, %v540
  %572 = vst.msk [vmem:[%s11 + $0x60] sm:$0xff] %vm559, %v545
  %573 = vst.msk [vmem:[%s11 + $0x68] sm:$0xff] %vm559, %v548
  %574 = vst.msk [vmem:[%s11 + $0x70] sm:$0xff] %vm559, %v553
  %575 = vst.msk [vmem:[%s11 + $0x78] sm:$0xff] %vm559, %v556
  %592 = vrot.lane.b32.xlu0 %v497, 96
  %v593 = vpop.permute.xlu0 %592
  %594 = vrot.lane.b32.xlu0 %v500, 96
  %v595 = vpop.permute.xlu0 %594
  %596 = vrot.lane.b32.xlu0 %v505, 96
  %v597 = vpop.permute.xlu0 %596
  %598 = vrot.lane.b32.xlu0 %v508, 96
  %v599 = vpop.permute.xlu0 %598
  %600 = vrot.lane.b32.xlu0 %v513, 96
  %v601 = vpop.permute.xlu0 %600
  %602 = vrot.lane.b32.xlu0 %v516, 96
  %v603 = vpop.permute.xlu0 %602
  %604 = vrot.lane.b32.xlu0 %v521, 96
  %v605 = vpop.permute.xlu0 %604
  %606 = vrot.lane.b32.xlu0 %v524, 96
  %v607 = vpop.permute.xlu0 %606
  %608 = vrot.lane.b32.xlu0 %v529, 96
  %v609 = vpop.permute.xlu0 %608
  %610 = vrot.lane.b32.xlu0 %v532, 96
  %v611 = vpop.permute.xlu0 %610
  %612 = vrot.lane.b32.xlu0 %v537, 96
  %v613 = vpop.permute.xlu0 %612
  %614 = vrot.lane.b32.xlu0 %v540, 96
  %v615 = vpop.permute.xlu0 %614
  %616 = vrot.lane.b32.xlu0 %v545, 96
  %v617 = vpop.permute.xlu0 %616
  %618 = vrot.lane.b32.xlu0 %v548, 96
  %v619 = vpop.permute.xlu0 %618
  %620 = vrot.lane.b32.xlu0 %v553, 96
  %v621 = vpop.permute.xlu0 %620
  %622 = vrot.lane.b32.xlu0 %v556, 96
  %v623 = vpop.permute.xlu0 %622
  %640 = vst.msk [vmem:[%s12] sm:$0xff] %vm559, %v593
  %641 = vst.msk [vmem:[%s12 + $0x8] sm:$0xff] %vm559, %v595
  %642 = vst.msk [vmem:[%s12 + $0x10] sm:$0xff] %vm559, %v597
  %643 = vst.msk [vmem:[%s12 + $0x18] sm:$0xff] %vm559, %v599
  %644 = vst.msk [vmem:[%s12 + $0x20] sm:$0xff] %vm559, %v601
  %645 = vst.msk [vmem:[%s12 + $0x28] sm:$0xff] %vm559, %v603
  %646 = vst.msk [vmem:[%s12 + $0x30] sm:$0xff] %vm559, %v605
  %647 = vst.msk [vmem:[%s12 + $0x38] sm:$0xff] %vm559, %v607
  %648 = vst.msk [vmem:[%s12 + $0x40] sm:$0xff] %vm559, %v609
  %649 = vst.msk [vmem:[%s12 + $0x48] sm:$0xff] %vm559, %v611
  %650 = vst.msk [vmem:[%s12 + $0x50] sm:$0xff] %vm559, %v613
  %651 = vst.msk [vmem:[%s12 + $0x58] sm:$0xff] %vm559, %v615
  %652 = vst.msk [vmem:[%s12 + $0x60] sm:$0xff] %vm559, %v617
  %653 = vst.msk [vmem:[%s12 + $0x68] sm:$0xff] %vm559, %v619
  %654 = vst.msk [vmem:[%s12 + $0x70] sm:$0xff] %vm559, %v621
  %655 = vst.msk [vmem:[%s12 + $0x78] sm:$0xff] %vm559, %v623
  %v656 = vmul.f32 %v497, 0.5
  %v657 = vmul.f32 %v500, 0.5
  %v658 = vmul.f32 %v505, 0.5
  %v659 = vmul.f32 %v508, 0.5
  %v660 = vmul.f32 %v513, 0.5
  %v661 = vmul.f32 %v516, 0.5
  %v662 = vmul.f32 %v521, 0.5
  %v663 = vmul.f32 %v524, 0.5
  %v664 = vmul.f32 %v529, 0.5
  %v665 = vmul.f32 %v532, 0.5
  %v666 = vmul.f32 %v537, 0.5
  %v667 = vmul.f32 %v540, 0.5
  %v668 = vmul.f32 %v545, 0.5
  %v669 = vmul.f32 %v548, 0.5
  %v670 = vmul.f32 %v553, 0.5
  %v671 = vmul.f32 %v556, 0.5
  %v672 = vmul.f32 %v656, 1.442695
  %v673 = vpow.pop %v672
  %v674 = vmul.f32 %v657, 1.442695
  %v675 = vpow.pop %v674
  %v676 = vmul.f32 %v658, 1.442695
  %v677 = vpow.pop %v676
  %v678 = vmul.f32 %v659, 1.442695
  %v679 = vpow.pop %v678
  %v680 = vmul.f32 %v660, 1.442695
  %v681 = vpow.pop %v680
  %v682 = vmul.f32 %v661, 1.442695
  %v683 = vpow.pop %v682
  %v684 = vmul.f32 %v662, 1.442695
  %v685 = vpow.pop %v684
  %v686 = vmul.f32 %v663, 1.442695
  %v687 = vpow.pop %v686
  %v688 = vmul.f32 %v664, 1.442695
  %v689 = vpow.pop %v688
  %v690 = vmul.f32 %v665, 1.442695
  %v691 = vpow.pop %v690
  %v692 = vmul.f32 %v666, 1.442695
  %v693 = vpow.pop %v692
  %v694 = vmul.f32 %v667, 1.442695
  %v695 = vpow.pop %v694
  %v696 = vmul.f32 %v668, 1.442695
  %v697 = vpow.pop %v696
  %v698 = vmul.f32 %v669, 1.442695
  %v699 = vpow.pop %v698
  %v700 = vmul.f32 %v670, 1.442695
  %v701 = vpow.pop %v700
  %v702 = vmul.f32 %v671, 1.442695
  %v703 = vpow.pop %v702
  %v704 = vld [vmem:[%s1] sm:$0xff]
  %v705 = vld [vmem:[%s1 + $0x8] sm:$0xff]
  %v706 = vld [vmem:[%s1 + $0x10] sm:$0xff]
  %v707 = vld [vmem:[%s1 + $0x18] sm:$0xff]
  %v708 = vld [vmem:[%s1 + $0x20] sm:$0xff]
  %v709 = vld [vmem:[%s1 + $0x28] sm:$0xff]
  %v710 = vld [vmem:[%s1 + $0x30] sm:$0xff]
  %v711 = vld [vmem:[%s1 + $0x38] sm:$0xff]
  %v712 = vld [vmem:[%s1 + $0x40] sm:$0xff]
  %v713 = vld [vmem:[%s1 + $0x48] sm:$0xff]
  %v714 = vld [vmem:[%s1 + $0x50] sm:$0xff]
  %v715 = vld [vmem:[%s1 + $0x58] sm:$0xff]
  %v716 = vld [vmem:[%s1 + $0x60] sm:$0xff]
  %v717 = vld [vmem:[%s1 + $0x68] sm:$0xff]
  %v718 = vld [vmem:[%s1 + $0x70] sm:$0xff]
  %v719 = vld [vmem:[%s1 + $0x78] sm:$0xff]
  %736 = vrot.lane.b32.xlu0 %v673, 96
  %v737 = vpop.permute.xlu0 %736
  %738 = vrot.lane.b32.xlu0 %v675, 96
  %v739 = vpop.permute.xlu0 %738
  %740 = vrot.lane.b32.xlu0 %v677, 96
  %v741 = vpop.permute.xlu0 %740
  %742 = vrot.lane.b32.xlu0 %v679, 96
  %v743 = vpop.permute.xlu0 %742
  %744 = vrot.lane.b32.xlu0 %v681, 96
  %v745 = vpop.permute.xlu0 %744
  %746 = vrot.lane.b32.xlu0 %v683, 96
  %v747 = vpop.permute.xlu0 %746
  %748 = vrot.lane.b32.xlu0 %v685, 96
  %v749 = vpop.permute.xlu0 %748
  %750 = vrot.lane.b32.xlu0 %v687, 96
  %v751 = vpop.permute.xlu0 %750
  %752 = vrot.lane.b32.xlu0 %v689, 96
  %v753 = vpop.permute.xlu0 %752
  %754 = vrot.lane.b32.xlu0 %v691, 96
  %v755 = vpop.permute.xlu0 %754
  %756 = vrot.lane.b32.xlu0 %v693, 96
  %v757 = vpop.permute.xlu0 %756
  %758 = vrot.lane.b32.xlu0 %v695, 96
  %v759 = vpop.permute.xlu0 %758
  %760 = vrot.lane.b32.xlu0 %v697, 96
  %v761 = vpop.permute.xlu0 %760
  %762 = vrot.lane.b32.xlu0 %v699, 96
  %v763 = vpop.permute.xlu0 %762
  %764 = vrot.lane.b32.xlu0 %v701, 96
  %v765 = vpop.permute.xlu0 %764
  %766 = vrot.lane.b32.xlu0 %v703, 96
  %v767 = vpop.permute.xlu0 %766
  %v784 = vmul.f32 %v704, %v737
  %v785 = vmul.f32 %v705, %v739
  %v786 = vmul.f32 %v706, %v741
  %v787 = vmul.f32 %v707, %v743
  %v788 = vmul.f32 %v708, %v745
  %v789 = vmul.f32 %v709, %v747
  %v790 = vmul.f32 %v710, %v749
  %v791 = vmul.f32 %v711, %v751
  %v792 = vmul.f32 %v712, %v753
  %v793 = vmul.f32 %v713, %v755
  %v794 = vmul.f32 %v714, %v757
  %v795 = vmul.f32 %v715, %v759
  %v796 = vmul.f32 %v716, %v761
  %v797 = vmul.f32 %v717, %v763
  %v798 = vmul.f32 %v718, %v765
  %v799 = vmul.f32 %v719, %v767
  %v800 = vadd.f32 %v497, %v784
  %v801 = vadd.f32 %v500, %v785
  %v802 = vadd.f32 %v505, %v786
  %v803 = vadd.f32 %v508, %v787
  %v804 = vadd.f32 %v513, %v788
  %v805 = vadd.f32 %v516, %v789
  %v806 = vadd.f32 %v521, %v790
  %v807 = vadd.f32 %v524, %v791
  %v808 = vadd.f32 %v529, %v792
  %v809 = vadd.f32 %v532, %v793
  %v810 = vadd.f32 %v537, %v794
  %v811 = vadd.f32 %v540, %v795
  %v812 = vadd.f32 %v545, %v796
  %v813 = vadd.f32 %v548, %v797
  %v814 = vadd.f32 %v553, %v798
  %v815 = vadd.f32 %v556, %v799
  %v816 = vpack.c.bf16 %v801, %v800
  %v817 = vpack.c.bf16 %v803, %v802
  %v818 = vpack.c.bf16 %v805, %v804
  %v819 = vpack.c.bf16 %v807, %v806
  %v820 = vpack.c.bf16 %v809, %v808
  %v821 = vpack.c.bf16 %v811, %v810
  %v822 = vpack.c.bf16 %v813, %v812
  %v823 = vpack.c.bf16 %v815, %v814
  %v824 = vld [vmem:[%s6] sm:$0xf]
  %v825 = vld [vmem:[%s6 + $0x4] sm:$0xf]
  %v826 = vld [vmem:[%s6 + $0x8] sm:$0xf]
  %v827 = vld [vmem:[%s6 + $0xc] sm:$0xf]
  %v828 = vld [vmem:[%s7] sm:$0x1]
  %v830 = vlaneseq
  %v831 = vshrl.u32 %v830, 7
  %v832 = vsub.s32 0, %v831
  %v833 = vrot.slane %v828, %v832
  %v839 = vunpack.c.l.b16 %v824
  %v840 = vunpack.c.l.b16 %v825
  %v841 = vunpack.c.l.b16 %v826
  %v842 = vunpack.c.l.b16 %v827
  %v843 = vpack.c.b16 %v840, %v839
  %v844 = vpack.c.b16 %v842, %v841
  %v848 = vsel %vm559, %v816, 0
  %v851 = vsel %vm559, %v817, 0
  %v854 = vsel %vm559, %v818, 0
  %v857 = vsel %vm559, %v819, 0
  %v860 = vsel %vm559, %v820, 0
  %v863 = vsel %vm559, %v821, 0
  %v866 = vsel %vm559, %v822, 0
  %v869 = vsel %vm559, %v823, 0
  %871 = vmatprep.subr.bf16.mxu0 0
  %872 = vmatpush1.bf16.msra.mxu0 %v843
  %873 = vmatprep.subr.bf16.mxu0 0
  %874 = vmatpush1.bf16.msra.mxu0 %v844
  %875 = vmatprep.subr.bf16.mxu0 0
  %876 = vmatpush1.bf16.msra.mxu0 0
  %877 = vmatprep.subr.bf16.mxu0 0
  %878 = vmatpush1.bf16.msra.mxu0 0
  %879 = vmatprep.subr.bf16.mxu0 0
  %880 = vmatpush1.bf16.msra.mxu0 0
  %881 = vmatprep.subr.bf16.mxu0 0
  %882 = vmatpush1.bf16.msra.mxu0 0
  %883 = vmatprep.subr.bf16.mxu0 0
  %884 = vmatpush1.bf16.msra.mxu0 0
  %885 = vmatprep.subr.bf16.mxu0 0
  %886 = vmatpush1.bf16.msra.mxu0 0
  %887 = vmatprep.subr.bf16.mxu0 0
  %888 = vmatpush1.bf16.msra.mxu0 0
  %889 = vmatprep.subr.bf16.mxu0 0
  %890 = vmatpush1.bf16.msra.mxu0 0
  %891 = vmatprep.subr.bf16.mxu0 0
  %892 = vmatpush1.bf16.msra.mxu0 0
  %893 = vmatprep.subr.bf16.mxu0 0
  %894 = vmatpush1.bf16.msra.mxu0 0
  %895 = vmatprep.subr.bf16.mxu0 0
  %896 = vmatpush1.bf16.msra.mxu0 0
  %897 = vmatprep.subr.bf16.mxu0 0
  %898 = vmatpush1.bf16.msra.mxu0 0
  %899 = vmatprep.subr.bf16.mxu0 0
  %900 = vmatpush1.bf16.msra.mxu0 0
  %901 = vmatprep.subr.bf16.mxu0 0
  %902 = vmatpush1.bf16.msra.mxu0 0
  %903 = vmatprep.mubr.bf16.mxu0 0
  %904 = vmatmul.mubr.bf16.gmra.mrb[0].mxu0 %v848
  %v905 = vpop.f32.mrb[0].mxu0
  %v906 = vadd.f32 %v833, %v905
  %v907 = vpop.f32.mrb[0].mxu0
  %v908 = vpop.f32.mrb[0].mxu0
  %v909 = vadd.f32 %v833, %v908
  %v910 = vpop.f32.mrb[0].mxu0
  %911 = vmatprep.mubr.bf16.mxu0 0
  %912 = vmatmul.mubr.bf16.gmra.mrb[0].mxu0 %v851
  %v913 = vpop.f32.mrb[0].mxu0
  %v914 = vadd.f32 %v833, %v913
  %v915 = vpop.f32.mrb[0].mxu0
  %v916 = vpop.f32.mrb[0].mxu0
  %v917 = vadd.f32 %v833, %v916
  %v918 = vpop.f32.mrb[0].mxu0
  %919 = vmatprep.mubr.bf16.mxu0 0
  %920 = vmatmul.mubr.bf16.gmra.mrb[0].mxu0 %v854
  %v921 = vpop.f32.mrb[0].mxu0
  %v922 = vadd.f32 %v833, %v921
  %v923 = vpop.f32.mrb[0].mxu0
  %v924 = vpop.f32.mrb[0].mxu0
  %v925 = vadd.f32 %v833, %v924
  %v926 = vpop.f32.mrb[0].mxu0
  %927 = vmatprep.mubr.bf16.mxu0 0
  %928 = vmatmul.mubr.bf16.gmra.mrb[0].mxu0 %v857
  %v929 = vpop.f32.mrb[0].mxu0
  %v930 = vadd.f32 %v833, %v929
  %v931 = vpop.f32.mrb[0].mxu0
  %v932 = vpop.f32.mrb[0].mxu0
  %v933 = vadd.f32 %v833, %v932
  %v934 = vpop.f32.mrb[0].mxu0
  %935 = vmatprep.mubr.bf16.mxu0 0
  %936 = vmatmul.mubr.bf16.gmra.mrb[0].mxu0 %v860
  %v937 = vpop.f32.mrb[0].mxu0
  %v938 = vadd.f32 %v833, %v937
  %v939 = vpop.f32.mrb[0].mxu0
  %v940 = vpop.f32.mrb[0].mxu0
  %v941 = vadd.f32 %v833, %v940
  %v942 = vpop.f32.mrb[0].mxu0
  %943 = vmatprep.mubr.bf16.mxu0 0
  %944 = vmatmul.mubr.bf16.gmra.mrb[0].mxu0 %v863
  %v945 = vpop.f32.mrb[0].mxu0
  %v946 = vadd.f32 %v833, %v945
  %v947 = vpop.f32.mrb[0].mxu0
  %v948 = vpop.f32.mrb[0].mxu0
  %v949 = vadd.f32 %v833, %v948
  %v950 = vpop.f32.mrb[0].mxu0
  %951 = vmatprep.mubr.bf16.mxu0 0
  %952 = vmatmul.mubr.bf16.gmra.mrb[0].mxu0 %v866
  %v953 = vpop.f32.mrb[0].mxu0
  %v954 = vadd.f32 %v833, %v953
  %v955 = vpop.f32.mrb[0].mxu0
  %v956 = vpop.f32.mrb[0].mxu0
  %v957 = vadd.f32 %v833, %v956
  %v958 = vpop.f32.mrb[0].mxu0
  %959 = vmatprep.mubr.bf16.mxu0 0
  %960 = vmatmul.mubr.bf16.gmra.mrb[0].mxu0 %v869
  %v961 = vpop.f32.mrb[0].mxu0
  %v962 = vadd.f32 %v833, %v961
  %v963 = vpop.f32.mrb[0].mxu0
  %v964 = vpop.f32.mrb[0].mxu0
  %v965 = vadd.f32 %v833, %v964
  %v966 = vpop.f32.mrb[0].mxu0
  %967 = vdwg.mxu0
  %v968 = vmax.f32 %v906, 0.0
  %v969 = vmax.f32 %v909, 0.0
  %v970 = vmax.f32 %v914, 0.0
  %v971 = vmax.f32 %v917, 0.0
  %v972 = vmax.f32 %v922, 0.0
  %v973 = vmax.f32 %v925, 0.0
  %v974 = vmax.f32 %v930, 0.0
  %v975 = vmax.f32 %v933, 0.0
  %v976 = vmax.f32 %v938, 0.0
  %v977 = vmax.f32 %v941, 0.0
  %v978 = vmax.f32 %v946, 0.0
  %v979 = vmax.f32 %v949, 0.0
  %v980 = vmax.f32 %v954, 0.0
  %v981 = vmax.f32 %v957, 0.0
  %v982 = vmax.f32 %v962, 0.0
  %v983 = vmax.f32 %v965, 0.0
  %v984 = vpack.c.bf16 %v969, %v968
  %v985 = vpack.c.bf16 %v971, %v970
  %v986 = vpack.c.bf16 %v973, %v972
  %v987 = vpack.c.bf16 %v975, %v974
  %v988 = vpack.c.bf16 %v977, %v976
  %v989 = vpack.c.bf16 %v979, %v978
  %v990 = vpack.c.bf16 %v981, %v980
  %v991 = vpack.c.bf16 %v983, %v982
  %v992 = vld [vmem:[%s8] sm:$0xff]
  %v993 = vld [vmem:[%s8 + $0x8] sm:$0xff]
  %v994 = vld [vmem:[%s8 + $0x10] sm:$0xff]
  %v995 = vld [vmem:[%s8 + $0x18] sm:$0xff]
  %v996 = vld [vmem:[%s8 + $0x20] sm:$0xff]
  %v997 = vld [vmem:[%s8 + $0x28] sm:$0xff]
  %v998 = vld [vmem:[%s8 + $0x30] sm:$0xff]
  %v999 = vld [vmem:[%s8 + $0x38] sm:$0xff]
  %v1000 = vld [vmem:[%s8 + $0x40] sm:$0xff]
  %v1001 = vld [vmem:[%s8 + $0x48] sm:$0xff]
  %v1002 = vld [vmem:[%s8 + $0x50] sm:$0xff]
  %v1003 = vld [vmem:[%s8 + $0x58] sm:$0xff]
  %v1004 = vld [vmem:[%s8 + $0x60] sm:$0xff]
  %v1005 = vld [vmem:[%s8 + $0x68] sm:$0xff]
  %v1006 = vld [vmem:[%s8 + $0x70] sm:$0xff]
  %v1007 = vld [vmem:[%s8 + $0x78] sm:$0xff]
  %v1008 = vld [vmem:[%s9] sm:$0x3]
  %v1010 = vlaneseq
  %v1011 = vshrl.u32 %v1010, 7
  %v1012 = vsub.s32 0, %v1011
  %v1013 = vrot.slane %v1008, %v1012
  %v1014 = vlaneseq
  %v1015 = vshrl.u32 %v1014, 7
  %v1016 = vsub.s32 1, %v1015
  %v1017 = vrot.slane %v1008, %v1016
  %v1036 = vunpack.c.l.b16 %v992
  %v1037 = vunpack.c.h.b16 %v992
  %v1038 = vunpack.c.l.b16 %v993
  %v1039 = vunpack.c.h.b16 %v993
  %v1040 = vunpack.c.l.b16 %v994
  %v1041 = vunpack.c.h.b16 %v994
  %v1042 = vunpack.c.l.b16 %v995
  %v1043 = vunpack.c.h.b16 %v995
  %v1044 = vunpack.c.l.b16 %v996
  %v1045 = vunpack.c.h.b16 %v996
  %v1046 = vunpack.c.l.b16 %v997
  %v1047 = vunpack.c.h.b16 %v997
  %v1048 = vunpack.c.l.b16 %v998
  %v1049 = vunpack.c.h.b16 %v998
  %v1050 = vunpack.c.l.b16 %v999
  %v1051 = vunpack.c.h.b16 %v999
  %v1052 = vunpack.c.l.b16 %v1000
  %v1053 = vunpack.c.h.b16 %v1000
  %v1054 = vunpack.c.l.b16 %v1001
  %v1055 = vunpack.c.h.b16 %v1001
  %v1056 = vunpack.c.l.b16 %v1002
  %v1057 = vunpack.c.h.b16 %v1002
  %v1058 = vunpack.c.l.b16 %v1003
  %v1059 = vunpack.c.h.b16 %v1003
  %v1060 = vunpack.c.l.b16 %v1004
  %v1061 = vunpack.c.h.b16 %v1004
  %v1062 = vunpack.c.l.b16 %v1005
  %v1063 = vunpack.c.h.b16 %v1005
  %v1064 = vunpack.c.l.b16 %v1006
  %v1065 = vunpack.c.h.b16 %v1006
  %v1066 = vunpack.c.l.b16 %v1007
  %v1067 = vunpack.c.h.b16 %v1007
  %v1068 = vpack.c.b16 %v1038, %v1036
  %v1069 = vpack.c.b16 %v1039, %v1037
  %v1070 = vpack.c.b16 %v1042, %v1040
  %v1071 = vpack.c.b16 %v1043, %v1041
  %v1072 = vpack.c.b16 %v1046, %v1044
  %v1073 = vpack.c.b16 %v1047, %v1045
  %v1074 = vpack.c.b16 %v1050, %v1048
  %v1075 = vpack.c.b16 %v1051, %v1049
  %v1076 = vpack.c.b16 %v1054, %v1052
  %v1077 = vpack.c.b16 %v1055, %v1053
  %v1078 = vpack.c.b16 %v1058, %v1056
  %v1079 = vpack.c.b16 %v1059, %v1057
  %v1080 = vpack.c.b16 %v1062, %v1060
  %v1081 = vpack.c.b16 %v1063, %v1061
  %v1082 = vpack.c.b16 %v1066, %v1064
  %v1083 = vpack.c.b16 %v1067, %v1065
  %1100 = vmatprep.subr.bf16.mxu0 %v1069
  %1101 = vmatpush1.bf16.msra.mxu0 %v1068
  %1102 = vmatprep.subr.bf16.mxu0 %v1071
  %1103 = vmatpush1.bf16.msra.mxu0 %v1070
  %1104 = vmatprep.subr.bf16.mxu0 %v1073
  %1105 = vmatpush1.bf16.msra.mxu0 %v1072
  %1106 = vmatprep.subr.bf16.mxu0 %v1075
  %1107 = vmatpush1.bf16.msra.mxu0 %v1074
  %1108 = vmatprep.subr.bf16.mxu0 %v1077
  %1109 = vmatpush1.bf16.msra.mxu0 %v1076
  %1110 = vmatprep.subr.bf16.mxu0 %v1079
  %1111 = vmatpush1.bf16.msra.mxu0 %v1078
  %1112 = vmatprep.subr.bf16.mxu0 %v1081
  %1113 = vmatpush1.bf16.msra.mxu0 %v1080
  %1114 = vmatprep.subr.bf16.mxu0 %v1083
  %1115 = vmatpush1.bf16.msra.mxu0 %v1082
  %1116 = vmatprep.subr.bf16.mxu0 0
  %1117 = vmatpush1.bf16.msra.mxu0 0
  %1118 = vmatprep.subr.bf16.mxu0 0
  %1119 = vmatpush1.bf16.msra.mxu0 0
  %1120 = vmatprep.subr.bf16.mxu0 0
  %1121 = vmatpush1.bf16.msra.mxu0 0
  %1122 = vmatprep.subr.bf16.mxu0 0
  %1123 = vmatpush1.bf16.msra.mxu0 0
  %1124 = vmatprep.subr.bf16.mxu0 0
  %1125 = vmatpush1.bf16.msra.mxu0 0
  %1126 = vmatprep.subr.bf16.mxu0 0
  %1127 = vmatpush1.bf16.msra.mxu0 0
  %1128 = vmatprep.subr.bf16.mxu0 0
  %1129 = vmatpush1.bf16.msra.mxu0 0
  %1130 = vmatprep.subr.bf16.mxu0 0
  %1131 = vmatpush1.bf16.msra.mxu0 0
  %1132 = vmatprep.mubr.bf16.mxu0 0
  %1133 = vmatmul.mubr.bf16.gmra.mrb[0].mxu0 %v984
  %v1134 = vpop.f32.mrb[0].mxu0
  %v1135 = vadd.f32 %v1013, %v1134
  %v1136 = vpop.f32.mrb[0].mxu0
  %v1137 = vadd.f32 %v1017, %v1136
  %v1138 = vpop.f32.mrb[0].mxu0
  %v1139 = vadd.f32 %v1013, %v1138
  %v1140 = vpop.f32.mrb[0].mxu0
  %v1141 = vadd.f32 %v1017, %v1140
  %1142 = vmatprep.mubr.bf16.mxu0 0
  %1143 = vmatmul.mubr.bf16.gmra.mrb[0].mxu0 %v985
  %v1144 = vpop.f32.mrb[0].mxu0
  %v1145 = vadd.f32 %v1013, %v1144
  %v1146 = vpop.f32.mrb[0].mxu0
  %v1147 = vadd.f32 %v1017, %v1146
  %v1148 = vpop.f32.mrb[0].mxu0
  %v1149 = vadd.f32 %v1013, %v1148
  %v1150 = vpop.f32.mrb[0].mxu0
  %v1151 = vadd.f32 %v1017, %v1150
  %1152 = vmatprep.mubr.bf16.mxu0 0
  %1153 = vmatmul.mubr.bf16.gmra.mrb[0].mxu0 %v986
  %v1154 = vpop.f32.mrb[0].mxu0
  %v1155 = vadd.f32 %v1013, %v1154
  %v1156 = vpop.f32.mrb[0].mxu0
  %v1157 = vadd.f32 %v1017, %v1156
  %v1158 = vpop.f32.mrb[0].mxu0
  %v1159 = vadd.f32 %v1013, %v1158
  %v1160 = vpop.f32.mrb[0].mxu0
  %v1161 = vadd.f32 %v1017, %v1160
  %1162 = vmatprep.mubr.bf16.mxu0 0
  %1163 = vmatmul.mubr.bf16.gmra.mrb[0].mxu0 %v987
  %v1164 = vpop.f32.mrb[0].mxu0
  %v1165 = vadd.f32 %v1013, %v1164
  %v1166 = vpop.f32.mrb[0].mxu0
  %v1167 = vadd.f32 %v1017, %v1166
  %v1168 = vpop.f32.mrb[0].mxu0
  %v1169 = vadd.f32 %v1013, %v1168
  %v1170 = vpop.f32.mrb[0].mxu0
  %v1171 = vadd.f32 %v1017, %v1170
  %1172 = vmatprep.mubr.bf16.mxu0 0
  %1173 = vmatmul.mubr.bf16.gmra.mrb[0].mxu0 %v988
  %v1174 = vpop.f32.mrb[0].mxu0
  %v1175 = vadd.f32 %v1013, %v1174
  %v1176 = vpop.f32.mrb[0].mxu0
  %v1177 = vadd.f32 %v1017, %v1176
  %v1178 = vpop.f32.mrb[0].mxu0
  %v1179 = vadd.f32 %v1013, %v1178
  %v1180 = vpop.f32.mrb[0].mxu0
  %v1181 = vadd.f32 %v1017, %v1180
  %1182 = vmatprep.mubr.bf16.mxu0 0
  %1183 = vmatmul.mubr.bf16.gmra.mrb[0].mxu0 %v989
  %v1184 = vpop.f32.mrb[0].mxu0
  %v1185 = vadd.f32 %v1013, %v1184
  %v1186 = vpop.f32.mrb[0].mxu0
  %v1187 = vadd.f32 %v1017, %v1186
  %v1188 = vpop.f32.mrb[0].mxu0
  %v1189 = vadd.f32 %v1013, %v1188
  %v1190 = vpop.f32.mrb[0].mxu0
  %v1191 = vadd.f32 %v1017, %v1190
  %1192 = vmatprep.mubr.bf16.mxu0 0
  %1193 = vmatmul.mubr.bf16.gmra.mrb[0].mxu0 %v990
  %v1194 = vpop.f32.mrb[0].mxu0
  %v1195 = vadd.f32 %v1013, %v1194
  %v1196 = vpop.f32.mrb[0].mxu0
  %v1197 = vadd.f32 %v1017, %v1196
  %v1198 = vpop.f32.mrb[0].mxu0
  %v1199 = vadd.f32 %v1013, %v1198
  %v1200 = vpop.f32.mrb[0].mxu0
  %v1201 = vadd.f32 %v1017, %v1200
  %1202 = vmatprep.mubr.bf16.mxu0 0
  %1203 = vmatmul.mubr.bf16.gmra.mrb[0].mxu0 %v991
  %v1204 = vpop.f32.mrb[0].mxu0
  %v1205 = vadd.f32 %v1013, %v1204
  %v1206 = vpop.f32.mrb[0].mxu0
  %v1207 = vadd.f32 %v1017, %v1206
  %v1208 = vpop.f32.mrb[0].mxu0
  %v1209 = vadd.f32 %v1013, %v1208
  %v1210 = vpop.f32.mrb[0].mxu0
  %v1211 = vadd.f32 %v1017, %v1210
  %1212 = vdwg.mxu0
  %v1213 = vand.u32 2147483647, %v1135
  %v1214 = vand.u32 2147483647, %v1137
  %v1215 = vand.u32 2147483647, %v1139
  %v1216 = vand.u32 2147483647, %v1141
  %v1217 = vand.u32 2147483647, %v1145
  %v1218 = vand.u32 2147483647, %v1147
  %v1219 = vand.u32 2147483647, %v1149
  %v1220 = vand.u32 2147483647, %v1151
  %v1221 = vand.u32 2147483647, %v1155
  %v1222 = vand.u32 2147483647, %v1157
  %v1223 = vand.u32 2147483647, %v1159
  %v1224 = vand.u32 2147483647, %v1161
  %v1225 = vand.u32 2147483647, %v1165
  %v1226 = vand.u32 2147483647, %v1167
  %v1227 = vand.u32 2147483647, %v1169
  %v1228 = vand.u32 2147483647, %v1171
  %v1229 = vand.u32 2147483647, %v1175
  %v1230 = vand.u32 2147483647, %v1177
  %v1231 = vand.u32 2147483647, %v1179
  %v1232 = vand.u32 2147483647, %v1181
  %v1233 = vand.u32 2147483647, %v1185
  %v1234 = vand.u32 2147483647, %v1187
  %v1235 = vand.u32 2147483647, %v1189
  %v1236 = vand.u32 2147483647, %v1191
  %v1237 = vand.u32 2147483647, %v1195
  %v1238 = vand.u32 2147483647, %v1197
  %v1239 = vand.u32 2147483647, %v1199
  %v1240 = vand.u32 2147483647, %v1201
  %v1241 = vand.u32 2147483647, %v1205
  %v1242 = vand.u32 2147483647, %v1207
  %v1243 = vand.u32 2147483647, %v1209
  %v1244 = vand.u32 2147483647, %v1211
  %v1245 = vsub.f32 0.0, %v1213
  %v1246 = vsub.f32 0.0, %v1214
  %v1247 = vsub.f32 0.0, %v1215
  %v1248 = vsub.f32 0.0, %v1216
  %v1249 = vsub.f32 0.0, %v1217
  %v1250 = vsub.f32 0.0, %v1218
  %v1251 = vsub.f32 0.0, %v1219
  %v1252 = vsub.f32 0.0, %v1220
  %v1253 = vsub.f32 0.0, %v1221
  %v1254 = vsub.f32 0.0, %v1222
  %v1255 = vsub.f32 0.0, %v1223
  %v1256 = vsub.f32 0.0, %v1224
  %v1257 = vsub.f32 0.0, %v1225
  %v1258 = vsub.f32 0.0, %v1226
  %v1259 = vsub.f32 0.0, %v1227
  %v1260 = vsub.f32 0.0, %v1228
  %v1261 = vsub.f32 0.0, %v1229
  %v1262 = vsub.f32 0.0, %v1230
  %v1263 = vsub.f32 0.0, %v1231
  %v1264 = vsub.f32 0.0, %v1232
  %v1265 = vsub.f32 0.0, %v1233
  %v1266 = vsub.f32 0.0, %v1234
  %v1267 = vsub.f32 0.0, %v1235
  %v1268 = vsub.f32 0.0, %v1236
  %v1269 = vsub.f32 0.0, %v1237
  %v1270 = vsub.f32 0.0, %v1238
  %v1271 = vsub.f32 0.0, %v1239
  %v1272 = vsub.f32 0.0, %v1240
  %v1273 = vsub.f32 0.0, %v1241
  %v1274 = vsub.f32 0.0, %v1242
  %v1275 = vsub.f32 0.0, %v1243
  %v1276 = vsub.f32 0.0, %v1244
  %v1277 = vmul.f32 %v1245, 1.442695
  %v1278 = vpow.pop %v1277
  %v1279 = vmul.f32 %v1246, 1.442695
  %v1280 = vpow.pop %v1279
  %v1281 = vmul.f32 %v1247, 1.442695
  %v1282 = vpow.pop %v1281
  %v1283 = vmul.f32 %v1248, 1.442695
  %v1284 = vpow.pop %v1283
  %v1285 = vmul.f32 %v1249, 1.442695
  %v1286 = vpow.pop %v1285
  %v1287 = vmul.f32 %v1250, 1.442695
  %v1288 = vpow.pop %v1287
  %v1289 = vmul.f32 %v1251, 1.442695
  %v1290 = vpow.pop %v1289
  %v1291 = vmul.f32 %v1252, 1.442695
  %v1292 = vpow.pop %v1291
  %v1293 = vmul.f32 %v1253, 1.442695
  %v1294 = vpow.pop %v1293
  %v1295 = vmul.f32 %v1254, 1.442695
  %v1296 = vpow.pop %v1295
  %v1297 = vmul.f32 %v1255, 1.442695
  %v1298 = vpow.pop %v1297
  %v1299 = vmul.f32 %v1256, 1.442695
  %v1300 = vpow.pop %v1299
  %v1301 = vmul.f32 %v1257, 1.442695
  %v1302 = vpow.pop %v1301
  %v1303 = vmul.f32 %v1258, 1.442695
  %v1304 = vpow.pop %v1303
  %v1305 = vmul.f32 %v1259, 1.442695
  %v1306 = vpow.pop %v1305
  %v1307 = vmul.f32 %v1260, 1.442695
  %v1308 = vpow.pop %v1307
  %v1309 = vmul.f32 %v1261, 1.442695
  %v1310 = vpow.pop %v1309
  %v1311 = vmul.f32 %v1262, 1.442695
  %v1312 = vpow.pop %v1311
  %v1313 = vmul.f32 %v1263, 1.442695
  %v1314 = vpow.pop %v1313
  %v1315 = vmul.f32 %v1264, 1.442695
  %v1316 = vpow.pop %v1315
  %v1317 = vmul.f32 %v1265, 1.442695
  %v1318 = vpow.pop %v1317
  %v1319 = vmul.f32 %v1266, 1.442695
  %v1320 = vpow.pop %v1319
  %v1321 = vmul.f32 %v1267, 1.442695
  %v1322 = vpow.pop %v1321
  %v1323 = vmul.f32 %v1268, 1.442695
  %v1324 = vpow.pop %v1323
  %v1325 = vmul.f32 %v1269, 1.442695
  %v1326 = vpow.pop %v1325
  %v1327 = vmul.f32 %v1270, 1.442695
  %v1328 = vpow.pop %v1327
  %v1329 = vmul.f32 %v1271, 1.442695
  %v1330 = vpow.pop %v1329
  %v1331 = vmul.f32 %v1272, 1.442695
  %v1332 = vpow.pop %v1331
  %v1333 = vmul.f32 %v1273, 1.442695
  %v1334 = vpow.pop %v1333
  %v1335 = vmul.f32 %v1274, 1.442695
  %v1336 = vpow.pop %v1335
  %v1337 = vmul.f32 %v1275, 1.442695
  %v1338 = vpow.pop %v1337
  %v1339 = vmul.f32 %v1276, 1.442695
  %v1340 = vpow.pop %v1339
  %v1341 = vadd.f32 %v1278, 1.0
  %v1342 = vadd.f32 %v1280, 1.0
  %v1343 = vadd.f32 %v1282, 1.0
  %v1344 = vadd.f32 %v1284, 1.0
  %v1345 = vadd.f32 %v1286, 1.0
  %v1346 = vadd.f32 %v1288, 1.0
  %v1347 = vadd.f32 %v1290, 1.0
  %v1348 = vadd.f32 %v1292, 1.0
  %v1349 = vadd.f32 %v1294, 1.0
  %v1350 = vadd.f32 %v1296, 1.0
  %v1351 = vadd.f32 %v1298, 1.0
  %v1352 = vadd.f32 %v1300, 1.0
  %v1353 = vadd.f32 %v1302, 1.0
  %v1354 = vadd.f32 %v1304, 1.0
  %v1355 = vadd.f32 %v1306, 1.0
  %v1356 = vadd.f32 %v1308, 1.0
  %v1357 = vadd.f32 %v1310, 1.0
  %v1358 = vadd.f32 %v1312, 1.0
  %v1359 = vadd.f32 %v1314, 1.0
  %v1360 = vadd.f32 %v1316, 1.0
  %v1361 = vadd.f32 %v1318, 1.0
  %v1362 = vadd.f32 %v1320, 1.0
  %v1363 = vadd.f32 %v1322, 1.0
  %v1364 = vadd.f32 %v1324, 1.0
  %v1365 = vadd.f32 %v1326, 1.0
  %v1366 = vadd.f32 %v1328, 1.0
  %v1367 = vadd.f32 %v1330, 1.0
  %v1368 = vadd.f32 %v1332, 1.0
  %v1369 = vadd.f32 %v1334, 1.0
  %v1370 = vadd.f32 %v1336, 1.0
  %v1371 = vadd.f32 %v1338, 1.0
  %v1372 = vadd.f32 %v1340, 1.0
  %v1373 = vrcp.pop %v1341
  %v1374 = vrcp.pop %v1342
  %v1375 = vrcp.pop %v1343
  %v1376 = vrcp.pop %v1344
  %v1377 = vrcp.pop %v1345
  %v1378 = vrcp.pop %v1346
  %v1379 = vrcp.pop %v1347
  %v1380 = vrcp.pop %v1348
  %v1381 = vrcp.pop %v1349
  %v1382 = vrcp.pop %v1350
  %v1383 = vrcp.pop %v1351
  %v1384 = vrcp.pop %v1352
  %v1385 = vrcp.pop %v1353
  %v1386 = vrcp.pop %v1354
  %v1387 = vrcp.pop %v1355
  %v1388 = vrcp.pop %v1356
  %v1389 = vrcp.pop %v1357
  %v1390 = vrcp.pop %v1358
  %v1391 = vrcp.pop %v1359
  %v1392 = vrcp.pop %v1360
  %v1393 = vrcp.pop %v1361
  %v1394 = vrcp.pop %v1362
  %v1395 = vrcp.pop %v1363
  %v1396 = vrcp.pop %v1364
  %v1397 = vrcp.pop %v1365
  %v1398 = vrcp.pop %v1366
  %v1399 = vrcp.pop %v1367
  %v1400 = vrcp.pop %v1368
  %v1401 = vrcp.pop %v1369
  %v1402 = vrcp.pop %v1370
  %v1403 = vrcp.pop %v1371
  %v1404 = vrcp.pop %v1372
  %vm1405 = vcmp.ge.f32.partialorder %v1135, 0.0
  %vm1406 = vcmp.ge.f32.partialorder %v1137, 0.0
  %vm1407 = vcmp.ge.f32.partialorder %v1139, 0.0
  %vm1408 = vcmp.ge.f32.partialorder %v1141, 0.0
  %vm1409 = vcmp.ge.f32.partialorder %v1145, 0.0
  %vm1410 = vcmp.ge.f32.partialorder %v1147, 0.0
  %vm1411 = vcmp.ge.f32.partialorder %v1149, 0.0
  %vm1412 = vcmp.ge.f32.partialorder %v1151, 0.0
  %vm1413 = vcmp.ge.f32.partialorder %v1155, 0.0
  %vm1414 = vcmp.ge.f32.partialorder %v1157, 0.0
  %vm1415 = vcmp.ge.f32.partialorder %v1159, 0.0
  %vm1416 = vcmp.ge.f32.partialorder %v1161, 0.0
  %vm1417 = vcmp.ge.f32.partialorder %v1165, 0.0
  %vm1418 = vcmp.ge.f32.partialorder %v1167, 0.0
  %vm1419 = vcmp.ge.f32.partialorder %v1169, 0.0
  %vm1420 = vcmp.ge.f32.partialorder %v1171, 0.0
  %vm1421 = vcmp.ge.f32.partialorder %v1175, 0.0
  %vm1422 = vcmp.ge.f32.partialorder %v1177, 0.0
  %vm1423 = vcmp.ge.f32.partialorder %v1179, 0.0
  %vm1424 = vcmp.ge.f32.partialorder %v1181, 0.0
  %vm1425 = vcmp.ge.f32.partialorder %v1185, 0.0
  %vm1426 = vcmp.ge.f32.partialorder %v1187, 0.0
  %vm1427 = vcmp.ge.f32.partialorder %v1189, 0.0
  %vm1428 = vcmp.ge.f32.partialorder %v1191, 0.0
  %vm1429 = vcmp.ge.f32.partialorder %v1195, 0.0
  %vm1430 = vcmp.ge.f32.partialorder %v1197, 0.0
  %vm1431 = vcmp.ge.f32.partialorder %v1199, 0.0
  %vm1432 = vcmp.ge.f32.partialorder %v1201, 0.0
  %vm1433 = vcmp.ge.f32.partialorder %v1205, 0.0
  %vm1434 = vcmp.ge.f32.partialorder %v1207, 0.0
  %vm1435 = vcmp.ge.f32.partialorder %v1209, 0.0
  %vm1436 = vcmp.ge.f32.partialorder %v1211, 0.0
  %v1437 = vmul.f32 %v1278, %v1373
  %v1438 = vmul.f32 %v1280, %v1374
  %v1439 = vmul.f32 %v1282, %v1375
  %v1440 = vmul.f32 %v1284, %v1376
  %v1441 = vmul.f32 %v1286, %v1377
  %v1442 = vmul.f32 %v1288, %v1378
  %v1443 = vmul.f32 %v1290, %v1379
  %v1444 = vmul.f32 %v1292, %v1380
  %v1445 = vmul.f32 %v1294, %v1381
  %v1446 = vmul.f32 %v1296, %v1382
  %v1447 = vmul.f32 %v1298, %v1383
  %v1448 = vmul.f32 %v1300, %v1384
  %v1449 = vmul.f32 %v1302, %v1385
  %v1450 = vmul.f32 %v1304, %v1386
  %v1451 = vmul.f32 %v1306, %v1387
  %v1452 = vmul.f32 %v1308, %v1388
  %v1453 = vmul.f32 %v1310, %v1389
  %v1454 = vmul.f32 %v1312, %v1390
  %v1455 = vmul.f32 %v1314, %v1391
  %v1456 = vmul.f32 %v1316, %v1392
  %v1457 = vmul.f32 %v1318, %v1393
  %v1458 = vmul.f32 %v1320, %v1394
  %v1459 = vmul.f32 %v1322, %v1395
  %v1460 = vmul.f32 %v1324, %v1396
  %v1461 = vmul.f32 %v1326, %v1397
  %v1462 = vmul.f32 %v1328, %v1398
  %v1463 = vmul.f32 %v1330, %v1399
  %v1464 = vmul.f32 %v1332, %v1400
  %v1465 = vmul.f32 %v1334, %v1401
  %v1466 = vmul.f32 %v1336, %v1402
  %v1467 = vmul.f32 %v1338, %v1403
  %v1468 = vmul.f32 %v1340, %v1404
  %v1469 = vsel %vm1405, %v1373, %v1437
  %v1470 = vsel %vm1406, %v1374, %v1438
  %v1471 = vsel %vm1407, %v1375, %v1439
  %v1472 = vsel %vm1408, %v1376, %v1440
  %v1473 = vsel %vm1409, %v1377, %v1441
  %v1474 = vsel %vm1410, %v1378, %v1442
  %v1475 = vsel %vm1411, %v1379, %v1443
  %v1476 = vsel %vm1412, %v1380, %v1444
  %v1477 = vsel %vm1413, %v1381, %v1445
  %v1478 = vsel %vm1414, %v1382, %v1446
  %v1479 = vsel %vm1415, %v1383, %v1447
  %v1480 = vsel %vm1416, %v1384, %v1448
  %v1481 = vsel %vm1417, %v1385, %v1449
  %v1482 = vsel %vm1418, %v1386, %v1450
  %v1483 = vsel %vm1419, %v1387, %v1451
  %v1484 = vsel %vm1420, %v1388, %v1452
  %v1485 = vsel %vm1421, %v1389, %v1453
  %v1486 = vsel %vm1422, %v1390, %v1454
  %v1487 = vsel %vm1423, %v1391, %v1455
  %v1488 = vsel %vm1424, %v1392, %v1456
  %v1489 = vsel %vm1425, %v1393, %v1457
  %v1490 = vsel %vm1426, %v1394, %v1458
  %v1491 = vsel %vm1427, %v1395, %v1459
  %v1492 = vsel %vm1428, %v1396, %v1460
  %v1493 = vsel %vm1429, %v1397, %v1461
  %v1494 = vsel %vm1430, %v1398, %v1462
  %v1495 = vsel %vm1431, %v1399, %v1463
  %v1496 = vsel %vm1432, %v1400, %v1464
  %v1497 = vsel %vm1433, %v1401, %v1465
  %v1498 = vsel %vm1434, %v1402, %v1466
  %v1499 = vsel %vm1435, %v1403, %v1467
  %v1500 = vsel %vm1436, %v1404, %v1468
  %v1501 = vpack.c.bf16 %v1471, %v1469
  %v1502 = vpack.c.bf16 %v1472, %v1470
  %v1503 = vpack.c.bf16 %v1475, %v1473
  %v1504 = vpack.c.bf16 %v1476, %v1474
  %v1505 = vpack.c.bf16 %v1479, %v1477
  %v1506 = vpack.c.bf16 %v1480, %v1478
  %v1507 = vpack.c.bf16 %v1483, %v1481
  %v1508 = vpack.c.bf16 %v1484, %v1482
  %v1509 = vpack.c.bf16 %v1487, %v1485
  %v1510 = vpack.c.bf16 %v1488, %v1486
  %v1511 = vpack.c.bf16 %v1491, %v1489
  %v1512 = vpack.c.bf16 %v1492, %v1490
  %v1513 = vpack.c.bf16 %v1495, %v1493
  %v1514 = vpack.c.bf16 %v1496, %v1494
  %v1515 = vpack.c.bf16 %v1499, %v1497
  %v1516 = vpack.c.bf16 %v1500, %v1498
  %v1533 = vunpack.c.l.b16 %v1501
  %v1534 = vunpack.c.l.b16 %v1502
  %v1535 = vunpack.c.h.b16 %v1501
  %v1536 = vunpack.c.h.b16 %v1502
  %v1537 = vunpack.c.l.b16 %v1503
  %v1538 = vunpack.c.l.b16 %v1504
  %v1539 = vunpack.c.h.b16 %v1503
  %v1540 = vunpack.c.h.b16 %v1504
  %v1541 = vunpack.c.l.b16 %v1505
  %v1542 = vunpack.c.l.b16 %v1506
  %v1543 = vunpack.c.h.b16 %v1505
  %v1544 = vunpack.c.h.b16 %v1506
  %v1545 = vunpack.c.l.b16 %v1507
  %v1546 = vunpack.c.l.b16 %v1508
  %v1547 = vunpack.c.h.b16 %v1507
  %v1548 = vunpack.c.h.b16 %v1508
  %v1549 = vunpack.c.l.b16 %v1509
  %v1550 = vunpack.c.l.b16 %v1510
  %v1551 = vunpack.c.h.b16 %v1509
  %v1552 = vunpack.c.h.b16 %v1510
  %v1553 = vunpack.c.l.b16 %v1511
  %v1554 = vunpack.c.l.b16 %v1512
  %v1555 = vunpack.c.h.b16 %v1511
  %v1556 = vunpack.c.h.b16 %v1512
  %v1557 = vunpack.c.l.b16 %v1513
  %v1558 = vunpack.c.l.b16 %v1514
  %v1559 = vunpack.c.h.b16 %v1513
  %v1560 = vunpack.c.h.b16 %v1514
  %v1561 = vunpack.c.l.b16 %v1515
  %v1562 = vunpack.c.l.b16 %v1516
  %v1563 = vunpack.c.h.b16 %v1515
  %v1564 = vunpack.c.h.b16 %v1516
  %v1565 = vpack.c.b16 %v1534, %v1533
  %v1566 = vpack.c.b16 %v1536, %v1535
  %v1567 = vpack.c.b16 %v1538, %v1537
  %v1568 = vpack.c.b16 %v1540, %v1539
  %v1569 = vpack.c.b16 %v1542, %v1541
  %v1570 = vpack.c.b16 %v1544, %v1543
  %v1571 = vpack.c.b16 %v1546, %v1545
  %v1572 = vpack.c.b16 %v1548, %v1547
  %v1573 = vpack.c.b16 %v1550, %v1549
  %v1574 = vpack.c.b16 %v1552, %v1551
  %v1575 = vpack.c.b16 %v1554, %v1553
  %v1576 = vpack.c.b16 %v1556, %v1555
  %v1577 = vpack.c.b16 %v1558, %v1557
  %v1578 = vpack.c.b16 %v1560, %v1559
  %v1579 = vpack.c.b16 %v1562, %v1561
  %v1580 = vpack.c.b16 %v1564, %v1563
  %1597 = vst [vmem:[%s10] sm:$0xff] %v1565
  %1598 = vst [vmem:[%s10 + $0x8] sm:$0xff] %v1566
  %1599 = vst [vmem:[%s10 + $0x10] sm:$0xff] %v1567
  %1600 = vst [vmem:[%s10 + $0x18] sm:$0xff] %v1568
  %1601 = vst [vmem:[%s10 + $0x20] sm:$0xff] %v1569
  %1602 = vst [vmem:[%s10 + $0x28] sm:$0xff] %v1570
  %1603 = vst [vmem:[%s10 + $0x30] sm:$0xff] %v1571
  %1604 = vst [vmem:[%s10 + $0x38] sm:$0xff] %v1572
  %1605 = vst [vmem:[%s10 + $0x40] sm:$0xff] %v1573
  %1606 = vst [vmem:[%s10 + $0x48] sm:$0xff] %v1574
  %1607 = vst [vmem:[%s10 + $0x50] sm:$0xff] %v1575
  %1608 = vst [vmem:[%s10 + $0x58] sm:$0xff] %v1576
  %1609 = vst [vmem:[%s10 + $0x60] sm:$0xff] %v1577
  %1610 = vst [vmem:[%s10 + $0x68] sm:$0xff] %v1578
  %1611 = vst [vmem:[%s10 + $0x70] sm:$0xff] %v1579
  %1612 = vst [vmem:[%s10 + $0x78] sm:$0xff] %v1580
  // Predicated region
  $region42: #{_lambda_.1} parent=0 // pred_check
    _
  $region43: #{_lambda_.1} parent=0 // pred_check_branch
    %1614 = sbr.rel (0) target = $region45
  $region44: #{_lambda_.1} parent=0 // pred_region
    _
  $region45: #{_lambda_.1} parent=0 // pred_fallthru
    _
  // Predicated region
  $region46: #{_lambda_.1} parent=0 // pred_check
    _
  $region47: #{_lambda_.1} parent=0 // pred_check_branch
    %1616 = sbr.rel (0) target = $region49
  $region48: #{_lambda_.1} parent=0 // pred_region
    _
  $region49: #{_lambda_.1} parent=0 // pred_fallthru
    _
  // Predicated region
  $region50: #{_lambda_.1} parent=0 // pred_check
    _
  $region51: #{_lambda_.1} parent=0 // pred_check_branch
    %1618 = sbr.rel (0) target = $region53
  $region52: #{_lambda_.1} parent=0 // pred_region
    _
  $region53: #{_lambda_.1} parent=0 // pred_fallthru
    _
  // Predicated region
  $region54: #{_lambda_.1} parent=0 // pred_check
    _
  $region55: #{_lambda_.1} parent=0 // pred_check_branch
    %1620 = sbr.rel (0) target = $region57
  $region56: #{_lambda_.1} parent=0 // pred_region
    _
  $region57: #{_lambda_.1} parent=0 // pred_fallthru
    _
  // Predicated region
  $region58: #{_lambda_.1} parent=0 // pred_check
    _
  $region59: #{_lambda_.1} parent=0 // pred_check_branch
    %1622 = sbr.rel (0) target = $region61
  $region60: #{_lambda_.1} parent=0 // pred_region
    _
  $region61: #{_lambda_.1} parent=0 // pred_fallthru
    _
  // Predicated region
  $region62: #{_lambda_.1} parent=0 // pred_check
    _
  $region63: #{_lambda_.1} parent=0 // pred_check_branch
    %1624 = sbr.rel (0) target = $region65
  $region64: #{_lambda_.1} parent=0 // pred_region
    _
  $region65: #{_lambda_.1} parent=0 // pred_fallthru
    _

</llo_original>
